<compile_context>
chip_gen: v7x
topology: tpu7x:2x2x1
jax: 0.10.0
libtpu: 0.0.40
codegen_flags: <defaults>
</compile_context>

<pallas_src>
import functools

import jax
import jax.numpy as jnp
from jax.experimental import pallas as pl
from jax.experimental.pallas import tpu as pltpu


GP = 128          # lane-aligned channel-group width used for padding
NEG_BIG = -1e30   # sentinel for masked positions / padded tag lanes (f32 only)


def _round_up(x, m):
    return (x + m - 1) // m * m


# ---------------------------------------------------------------------------
# Fused kernel: (gather + char CNN + position max) + word 1x1 conv head
#               + hidden2tag + torch.max(feats, 1), one (SB, 128) slab out.
# ---------------------------------------------------------------------------
def ner_fused_kernel(idx_ref, sn_ref, wc_ref, cb_ref, ws_ref, w1_ref, b1_ref,
                     w2_ref, b2_ref, out_ref, *, L, Lp, oc, tags):
    # idx_ref : (3, NB, 1) int32  conv-tap char indices (pre-shifted, -1 = pad)
    # sn_ref  : (SB, 1)    int32  word indices for this sentence block
    # wc_ref  : (3, NCp, GP)      char_emb @ conv_w[kh], zero-padded
    # cb_ref  : (1, GP)           char conv bias (zeros beyond oc)
    # ws_ref  : (Vp, GP)          col0 = word_emb row max, col1 = row min
    # w1_ref  : (1, C2)           conv1 weight (torch (C2,1,1,1) flattened)
    # b1_ref  : (1, C2)           conv1 bias
    # w2_ref  : (C2, GP)          hidden2tag weight, zero-padded beyond tags
    # b2_ref  : (1, GP)           hidden2tag bias, NEG_BIG beyond tags
    # out_ref : (SB, GP)          [:, :tags]=feats, [:, tags]=score, [:, tags+1]=tag
    SB = sn_ref.shape[0]
    NB = idx_ref.shape[1]
    NCp = wc_ref.shape[1]
    Vp = ws_ref.shape[0]
    C2 = w1_ref.shape[1]

    # ---- char CNN: gather folded into three one-hot selection matmuls -------
    # conv[r, c] = sum_kh (char_emb[idx_kh[r]] @ conv_w[kh])[c]; -1 -> zero row.
    kl = jax.lax.broadcasted_iota(jnp.int32, (NB, NCp), 1)
    conv = (
        jnp.dot((kl == idx_ref[0]).astype(jnp.float32), wc_ref[0],
                preferred_element_type=jnp.float32)
        + jnp.dot((kl == idx_ref[1]).astype(jnp.float32), wc_ref[1],
                  preferred_element_type=jnp.float32)
        + jnp.dot((kl == idx_ref[2]).astype(jnp.float32), wc_ref[2],
                  preferred_element_type=jnp.float32))            # (NB, GP)

    # position axis padded to a multiple of 8 -> tile-preserving reshape
    conv = conv.reshape(SB, Lp, GP)
    pos = jax.lax.broadcasted_iota(jnp.int32, (SB, Lp, GP), 1)
    conv = jnp.where(pos < L + 2, conv, NEG_BIG)   # only the L+2 torch conv rows
    # bias is per-channel constant -> adding it after the position max is exact
    char_feat = jnp.max(conv, axis=1) + cb_ref[...]               # (SB, GP)

    # ---- word-embedding row max/min selected by a one-hot matmul ------------
    vl = jax.lax.broadcasted_iota(jnp.int32, (SB, Vp), 1)
    wsel = jnp.dot((vl == sn_ref[...]).astype(jnp.float32), ws_ref[...],
                   preferred_element_type=jnp.float32)            # (SB, GP)
    we_max = wsel[:, 0:1]                                         # (SB, 1)
    we_min = wsel[:, 1:2]                                         # (SB, 1)

    # ---- word head: 1x1 conv (in_ch=1) + MaxPool2d((1, D)), algebraic form --
    # Exact ONLY for word_encoder == 'CNN' (in_channels=1, 1x1 kernel,
    # full-width pool):  max_w(x[s,w]*w1[c]) = w1[c]*xmax[s] if w1[c]>=0
    #                                          else w1[c]*xmin[s].
    lane = jax.lax.broadcasted_iota(jnp.int32, (SB, GP), 1)
    valid = lane < oc
    cf_max = jnp.max(jnp.where(valid, char_feat, -jnp.inf), axis=1, keepdims=True)
    cf_min = jnp.min(jnp.where(valid, char_feat, jnp.inf), axis=1, keepdims=True)
    xmax = jnp.maximum(we_max, cf_max)                            # (SB, 1)
    xmin = jnp.minimum(we_min, cf_min)                            # (SB, 1)

    w1 = jnp.broadcast_to(w1_ref[...], (SB, C2))
    xsel = jnp.where(w1 >= 0.0,
                     jnp.broadcast_to(xmax, (SB, C2)),
                     jnp.broadcast_to(xmin, (SB, C2)))
    pooled = xsel * w1 + b1_ref[...]                              # (SB, C2)

    # ---- hidden2tag (lane-padded to GP; padded lanes carry NEG_BIG bias) ----
    feats = jnp.dot(pooled, w2_ref[...],
                    preferred_element_type=jnp.float32) + b2_ref[...]   # (SB, GP)

    # torch.max(feats, 1): value + first-index argmax (padded lanes never win)
    score = jnp.max(feats, axis=1, keepdims=True)                 # (SB, 1)
    tag = jnp.min(jnp.where(feats == score, lane, GP), axis=1,
                  keepdims=True).astype(jnp.float32)              # exact small int

    # ---- pack into a single lane-dense (SB, GP) slab -------------------------
    slab = jnp.where(lane == tags, jnp.broadcast_to(score, (SB, GP)), feats)
    slab = jnp.where(lane == tags + 1, jnp.broadcast_to(tag, (SB, GP)), slab)
    out_ref[...] = slab


# ---------------------------------------------------------------------------
# Parameter init (deterministic, mirrors the module's init schemes)
# ---------------------------------------------------------------------------
def init_params(key, vocab_size, n_chars, emb_dim, hidden_dim, tag_size,
                char_emb_dim=25, char_out_dim=25):
    ks = jax.random.split(key, 8)
    C2 = 2 * hidden_dim

    bc = (3.0 / char_emb_dim) ** 0.5
    char_emb = jax.random.uniform(ks[0], (n_chars, char_emb_dim),
                                  minval=-bc, maxval=bc, dtype=jnp.float32)
    word_emb = jax.random.uniform(ks[1], (vocab_size, emb_dim),
                                  minval=-0.1, maxval=0.1, dtype=jnp.float32)
    # char_cnn3: Conv2d(1, OC, (3, Ce), padding=(2,0)) -> stored as (3, Ce, OC)
    fan_in = 3 * char_emb_dim
    bw = (1.0 / fan_in) ** 0.5
    char_w = jax.random.uniform(ks[2], (3, char_emb_dim, char_out_dim),
                                minval=-bw, maxval=bw, dtype=jnp.float32)
    char_b = jax.random.uniform(ks[3], (1, char_out_dim),
                                minval=-bw, maxval=bw, dtype=jnp.float32)
    # conv1: Conv2d(1, 2H, (1,1)), xavier_uniform weight, default bias init
    a = (6.0 / (1 + C2)) ** 0.5
    w1 = jax.random.uniform(ks[4], (1, C2), minval=-a, maxval=a, dtype=jnp.float32)
    b1 = jax.random.uniform(ks[5], (1, C2), minval=-1.0, maxval=1.0, dtype=jnp.float32)
    # hidden2tag: Linear(2H, T), uniform(+-sqrt(6/(T+2H))), bias zero
    bl = (6.0 / (tag_size + C2)) ** 0.5
    w2 = jax.random.uniform(ks[6], (C2, tag_size), minval=-bl, maxval=bl,
                            dtype=jnp.float32)
    b2 = jnp.zeros((1, tag_size), dtype=jnp.float32)
    return dict(char_emb=char_emb, word_emb=word_emb, char_w=char_w,
                char_b=char_b, w1=w1, b1=b1, w2=w2, b2=b2)


def pack_params(raw):
    """One-time repack: fold embeddings into the conv/stat tables the kernel uses."""
    oc = raw["char_w"].shape[2]
    C2 = raw["w1"].shape[1]
    T = raw["w2"].shape[1]
    n_chars = raw["char_emb"].shape[0]
    vocab = raw["word_emb"].shape[0]
    NCp = _round_up(n_chars, GP)
    Vp = _round_up(vocab, GP)
    assert oc <= GP and C2 <= GP and T + 2 <= GP

    # char-embedding gather folded into the conv weight:
    #   wc[kh, k, c] = char_emb[k] . conv_w[kh][:, c]   (rows >= n_chars are 0)
    wc = jnp.zeros((3, NCp, GP), jnp.float32)
    for kh in range(3):
        wc = wc.at[kh, :n_chars, :oc].set(raw["char_emb"] @ raw["char_w"][kh])
    cb = jnp.zeros((1, GP), jnp.float32).at[:, :oc].set(raw["char_b"])

    # word-embedding table pre-reduced to per-row (max, min)
    ws = jnp.zeros((Vp, GP), jnp.float32)
    ws = ws.at[:vocab, 0].set(jnp.max(raw["word_emb"], axis=1))
    ws = ws.at[:vocab, 1].set(jnp.min(raw["word_emb"], axis=1))

    w2 = jnp.zeros((C2, GP), jnp.float32).at[:, :T].set(raw["w2"])
    b2 = jnp.full((1, GP), NEG_BIG, jnp.float32).at[:, :T].set(raw["b2"])
    return dict(wc=wc, cb=cb, ws=ws, w1=raw["w1"], b1=raw["b1"], w2=w2, b2=b2)


# ---------------------------------------------------------------------------
# Forward wrapper (index plumbing in XLA, all math in one Pallas kernel)
# ---------------------------------------------------------------------------
@functools.partial(jax.jit, static_argnames=("oc", "tags", "sent_block"))
def ner_forward(packed, sentence, chars, *, oc, tags, sent_block=8):
    # sentence : (S,)   int32 word indices
    # chars    : (S, L) int32 char indices per word
    S = sentence.shape[0]
    L = chars.shape[1]
    Sp = _round_up(S, sent_block)           # sentence rows, padded to the grid block
    Lp = _round_up(L + 4, 8)                # conv padding=(2,0) built at index time
    N = Sp * Lp
    NB = sent_block * Lp

    # Padded char-index grid; -1 selects an all-zero row of the folded table.
    chars_pad = jnp.full((Sp, Lp), -1, jnp.int32)
    chars_pad = chars_pad.at[:S, 2:2 + L].set(chars.astype(jnp.int32))
    flat = jnp.concatenate([chars_pad.reshape(N), jnp.full((2,), -1, jnp.int32)])
    # Three pre-shifted copies = the three conv taps (no in-kernel roll/concat).
    idx = jnp.stack([flat[0:N], flat[1:N + 1], flat[2:N + 2]],
                    axis=0).reshape(3, N, 1)

    sent = jnp.zeros((Sp, 1), jnp.int32).at[:S, 0].set(sentence.astype(jnp.int32))

    NCp = packed["wc"].shape[1]
    Vp = packed["ws"].shape[0]
    C2 = packed["w1"].shape[1]
    grid = (Sp // sent_block,)

    flops = grid[0] * (3 * 2 * NB * NCp * GP
                       + 2 * sent_block * Vp * GP
                       + 2 * sent_block * C2 * GP)
    bytes_accessed = 4 * (idx.size + sent.size + packed["wc"].size
                          + packed["cb"].size + packed["ws"].size
                          + packed["w1"].size + packed["b1"].size
                          + packed["w2"].size + packed["b2"].size + Sp * GP)

    slab = pl.pallas_call(
        functools.partial(ner_fused_kernel, L=L, Lp=Lp, oc=oc, tags=tags),
        out_shape=jax.ShapeDtypeStruct((Sp, GP), jnp.float32),
        grid=grid,
        in_specs=[
            pl.BlockSpec((3, NB, 1), lambda i: (0, i, 0)),        # idx
            pl.BlockSpec((sent_block, 1), lambda i: (i, 0)),      # sentence
            pl.BlockSpec((3, NCp, GP), lambda i: (0, 0, 0)),      # wc table
            pl.BlockSpec((1, GP), lambda i: (0, 0)),              # char bias
            pl.BlockSpec((Vp, GP), lambda i: (0, 0)),             # word stats
            pl.BlockSpec((1, C2), lambda i: (0, 0)),              # w1
            pl.BlockSpec((1, C2), lambda i: (0, 0)),              # b1
            pl.BlockSpec((C2, GP), lambda i: (0, 0)),             # w2
            pl.BlockSpec((1, GP), lambda i: (0, 0)),              # b2
        ],
        out_specs=pl.BlockSpec((sent_block, GP), lambda i: (i, 0)),
        compiler_params=pltpu.CompilerParams(
            dimension_semantics=("parallel",)),                   # v7x: both TCs
        cost_estimate=pl.CostEstimate(flops=flops, transcendentals=0,
                                      bytes_accessed=bytes_accessed),
    )(idx, sent, packed["wc"], packed["cb"], packed["ws"],
      packed["w1"], packed["b1"], packed["w2"], packed["b2"])

    slab = slab[:S]
    feats = slab[:, :tags]                                        # (S, T)
    score = slab[:, tags]                                         # (S,)
    tag_seq = slab[:, tags + 1].astype(jnp.int32)                 # (S,)
    # matches torch forward: (score, tag_seq); feats returned for inspection
    return score, tag_seq, feats


# ---------------------------------------------------------------------------
# Pure-JAX reference (direct transcription of the torch CNN/CNN path)
# ---------------------------------------------------------------------------
def ner_reference(raw, sentence, chars):
    L = chars.shape[1]
    lout = L + 2
    ce = jnp.take(raw["char_emb"], chars, axis=0)                 # (S, L, Ce)
    ce_pad = jnp.pad(ce, ((0, 0), (2, 2), (0, 0)))                # (S, L+4, Ce)
    conv = sum(jnp.einsum("sle,eo->slo", ce_pad[:, kh:kh + lout, :],
                          raw["char_w"][kh]) for kh in range(3))
    char_feat = jnp.max(conv, axis=1) + raw["char_b"]             # (S, OC)
    we = jnp.take(raw["word_emb"], sentence, axis=0)              # (S, E)
    x = jnp.concatenate([we, char_feat], axis=1)                  # (S, D)
    y = x[:, None, :] * raw["w1"].reshape(1, -1, 1)               # (S, C2, D)
    pooled = jnp.max(y, axis=-1) + raw["b1"]                      # (S, C2)
    feats = pooled @ raw["w2"] + raw["b2"]                        # (S, T)
    return jnp.max(feats, axis=1), jnp.argmax(feats, axis=1), feats


if __name__ == "__main__":
    S = 16           # sentence length (two grid blocks -> exercises parallel axis)
    L = 12           # max chars per word
    VOCAB = 50
    N_CHARS = 30
    EMB_DIM = 32     # args.embedding_dim
    HIDDEN = 32      # args.hidden_dim  (conv1 out channels = 2*HIDDEN)
    TAGS = 5         # tag set size
    CHAR_EMB = 25
    CHAR_OUT = 25

    key = jax.random.PRNGKey(0)
    kp, ks, kc = jax.random.split(key, 3)

    raw = init_params(kp, VOCAB, N_CHARS, EMB_DIM, HIDDEN, TAGS,
                      char_emb_dim=CHAR_EMB, char_out_dim=CHAR_OUT)
    packed = pack_params(raw)
    sentence = jax.random.randint(ks, (S,), 0, VOCAB, dtype=jnp.int32)
    chars = jax.random.randint(kc, (S, L), 0, N_CHARS, dtype=jnp.int32)

    score, tag_seq, feats = ner_forward(packed, sentence, chars,
                                        oc=CHAR_OUT, tags=TAGS, sent_block=8)
    jax.block_until_ready((score, tag_seq, feats))

    assert score.shape == (S,)
    assert tag_seq.shape == (S,)
    assert feats.shape == (S, TAGS)

    # correctness vs. pure-JAX reference of the torch forward
    ref_score, _, ref_feats = ner_reference(raw, sentence, chars)
    assert jnp.allclose(feats, ref_feats, rtol=1e-3, atol=1e-4)
    assert jnp.allclose(score, ref_score, rtol=1e-3, atol=1e-4)
    # in-kernel first-index argmax is consistent with the emitted feats
    assert jnp.array_equal(tag_seq, jnp.argmax(feats, axis=1).astype(jnp.int32))

    print("KERNEL_OK")
</pallas_src>

<mosaic_0001>
module attributes {stable_mosaic.version = 11 : i64} {
  func.func @ner_fused_kernel(%arg0: i32, %arg1: memref<3x128x1xi32, #tpu.memory_space<vmem>>, %arg2: memref<8x1xi32, #tpu.memory_space<vmem>>, %arg3: memref<3x128x128xf32, #tpu.memory_space<vmem>>, %arg4: memref<1x128xf32, #tpu.memory_space<vmem>>, %arg5: memref<128x128xf32, #tpu.memory_space<vmem>>, %arg6: memref<1x64xf32, #tpu.memory_space<vmem>>, %arg7: memref<1x64xf32, #tpu.memory_space<vmem>>, %arg8: memref<64x128xf32, #tpu.memory_space<vmem>>, %arg9: memref<1x128xf32, #tpu.memory_space<vmem>>, %arg10: memref<8x128xf32, #tpu.memory_space<vmem>>) attributes {dimension_semantics = [#tpu.dimension_semantics<parallel>], iteration_bounds = array<i64: 2>, scalar_prefetch = 0 : i64, scratch_operands = 0 : i64, tpu.core_type = #tpu.core_type<tc>, window_params = [{transform_indices = @transform_0, window_bounds = array<i64: 3, 128, 1>}, {transform_indices = @transform_1, window_bounds = array<i64: 8, 1>}, {pipeline_mode = #tpu.pipeline_mode<synchronous>, transform_indices = @transform_2, window_bounds = array<i64: 3, 128, 128>}, {pipeline_mode = #tpu.pipeline_mode<synchronous>, transform_indices = @transform_3, window_bounds = array<i64: 1, 128>}, {pipeline_mode = #tpu.pipeline_mode<synchronous>, transform_indices = @transform_4, window_bounds = array<i64: 128, 128>}, {pipeline_mode = #tpu.pipeline_mode<synchronous>, transform_indices = @transform_5, window_bounds = array<i64: 1, 64>}, {pipeline_mode = #tpu.pipeline_mode<synchronous>, transform_indices = @transform_6, window_bounds = array<i64: 1, 64>}, {pipeline_mode = #tpu.pipeline_mode<synchronous>, transform_indices = @transform_7, window_bounds = array<i64: 64, 128>}, {pipeline_mode = #tpu.pipeline_mode<synchronous>, transform_indices = @transform_8, window_bounds = array<i64: 1, 128>}, {transform_indices = @transform_9, window_bounds = array<i64: 8, 128>}]} {
    %0 = tpu.iota {dimensions = array<i32: 1>} : vector<128x128xi32>
    %c0 = arith.constant 0 : index
    %c0_0 = arith.constant 0 : index
    %c0_1 = arith.constant 0 : index
    %1 = vector.load %arg1[%c0, %c0_0, %c0_1] : memref<3x128x1xi32, #tpu.memory_space<vmem>>, vector<1x128x1xi32>
    %2 = vector.shape_cast %1 : vector<1x128x1xi32> to vector<128x1xi32>
    %3 = vector.broadcast %2 : vector<128x1xi32> to vector<128x128xi32>
    %4 = arith.cmpi eq, %0, %3 : vector<128x128xi32>
    %5 = arith.extui %4 : vector<128x128xi1> to vector<128x128xi32>
    %6 = arith.sitofp %5 : vector<128x128xi32> to vector<128x128xf32>
    %c0_2 = arith.constant 0 : index
    %c0_3 = arith.constant 0 : index
    %c0_4 = arith.constant 0 : index
    %7 = vector.load %arg3[%c0_2, %c0_3, %c0_4] : memref<3x128x128xf32, #tpu.memory_space<vmem>>, vector<1x128x128xf32>
    %8 = vector.shape_cast %7 : vector<1x128x128xf32> to vector<128x128xf32>
    %cst = arith.constant dense<0.000000e+00> : vector<128x128xf32>
    %9 = tpu.matmul %6, %8, %cst {dimension_numbers = #tpu.dot_dimension_numbers<[1], [0], [0], [1], [0, 0, 1, 1], [], []>} : vector<128x128xf32>, vector<128x128xf32>, vector<128x128xf32> -> vector<128x128xf32>
    %c1 = arith.constant 1 : index
    %c0_5 = arith.constant 0 : index
    %c0_6 = arith.constant 0 : index
    %10 = vector.load %arg1[%c1, %c0_5, %c0_6] : memref<3x128x1xi32, #tpu.memory_space<vmem>>, vector<1x128x1xi32>
    %11 = vector.shape_cast %10 : vector<1x128x1xi32> to vector<128x1xi32>
    %12 = vector.broadcast %11 : vector<128x1xi32> to vector<128x128xi32>
    %13 = arith.cmpi eq, %0, %12 : vector<128x128xi32>
    %14 = arith.extui %13 : vector<128x128xi1> to vector<128x128xi32>
    %15 = arith.sitofp %14 : vector<128x128xi32> to vector<128x128xf32>
    %c1_7 = arith.constant 1 : index
    %c0_8 = arith.constant 0 : index
    %c0_9 = arith.constant 0 : index
    %16 = vector.load %arg3[%c1_7, %c0_8, %c0_9] : memref<3x128x128xf32, #tpu.memory_space<vmem>>, vector<1x128x128xf32>
    %17 = vector.shape_cast %16 : vector<1x128x128xf32> to vector<128x128xf32>
    %cst_10 = arith.constant dense<0.000000e+00> : vector<128x128xf32>
    %18 = tpu.matmul %15, %17, %cst_10 {dimension_numbers = #tpu.dot_dimension_numbers<[1], [0], [0], [1], [0, 0, 1, 1], [], []>} : vector<128x128xf32>, vector<128x128xf32>, vector<128x128xf32> -> vector<128x128xf32>
    %19 = arith.addf %9, %18 : vector<128x128xf32>
    %c2 = arith.constant 2 : index
    %c0_11 = arith.constant 0 : index
    %c0_12 = arith.constant 0 : index
    %20 = vector.load %arg1[%c2, %c0_11, %c0_12] : memref<3x128x1xi32, #tpu.memory_space<vmem>>, vector<1x128x1xi32>
    %21 = vector.shape_cast %20 : vector<1x128x1xi32> to vector<128x1xi32>
    %22 = vector.broadcast %21 : vector<128x1xi32> to vector<128x128xi32>
    %23 = arith.cmpi eq, %0, %22 : vector<128x128xi32>
    %24 = arith.extui %23 : vector<128x128xi1> to vector<128x128xi32>
    %25 = arith.sitofp %24 : vector<128x128xi32> to vector<128x128xf32>
    %c2_13 = arith.constant 2 : index
    %c0_14 = arith.constant 0 : index
    %c0_15 = arith.constant 0 : index
    %26 = vector.load %arg3[%c2_13, %c0_14, %c0_15] : memref<3x128x128xf32, #tpu.memory_space<vmem>>, vector<1x128x128xf32>
    %27 = vector.shape_cast %26 : vector<1x128x128xf32> to vector<128x128xf32>
    %cst_16 = arith.constant dense<0.000000e+00> : vector<128x128xf32>
    %28 = tpu.matmul %25, %27, %cst_16 {dimension_numbers = #tpu.dot_dimension_numbers<[1], [0], [0], [1], [0, 0, 1, 1], [], []>} : vector<128x128xf32>, vector<128x128xf32>, vector<128x128xf32> -> vector<128x128xf32>
    %29 = arith.addf %19, %28 : vector<128x128xf32>
    %30 = vector.shape_cast %29 : vector<128x128xf32> to vector<8x16x128xf32>
    %31 = tpu.iota {dimensions = array<i32: 1>} : vector<8x16x128xi32>
    %c14_i32 = arith.constant 14 : i32
    %32 = vector.broadcast %c14_i32 : i32 to vector<8x16x128xi32>
    %33 = arith.cmpi slt, %31, %32 : vector<8x16x128xi32>
    %cst_17 = arith.constant -1.000000e+30 : f32
    %34 = vector.broadcast %cst_17 : f32 to vector<8x16x128xf32>
    %35 = arith.select %33, %30, %34 : vector<8x16x128xi1>, vector<8x16x128xf32>
    %cst_18 = arith.constant dense<0xFF800000> : vector<8x128xf32>
    %36 = vector.multi_reduction <maximumf>, %35, %cst_18 [1] : vector<8x16x128xf32> to vector<8x128xf32>
    %c0_19 = arith.constant 0 : index
    %c0_20 = arith.constant 0 : index
    %37 = vector.load %arg4[%c0_19, %c0_20] : memref<1x128xf32, #tpu.memory_space<vmem>>, vector<1x128xf32>
    %38 = vector.broadcast %37 : vector<1x128xf32> to vector<8x128xf32>
    %39 = arith.addf %36, %38 : vector<8x128xf32>
    %40 = tpu.iota {dimensions = array<i32: 1>} : vector<8x128xi32>
    %c0_21 = arith.constant 0 : index
    %c0_22 = arith.constant 0 : index
    %41 = vector.load %arg2[%c0_21, %c0_22] : memref<8x1xi32, #tpu.memory_space<vmem>>, vector<8x1xi32>
    %42 = vector.broadcast %41 : vector<8x1xi32> to vector<8x128xi32>
    %43 = arith.cmpi eq, %40, %42 : vector<8x128xi32>
    %44 = arith.extui %43 : vector<8x128xi1> to vector<8x128xi32>
    %45 = arith.sitofp %44 : vector<8x128xi32> to vector<8x128xf32>
    %c0_23 = arith.constant 0 : index
    %c0_24 = arith.constant 0 : index
    %46 = vector.load %arg5[%c0_23, %c0_24] : memref<128x128xf32, #tpu.memory_space<vmem>>, vector<128x128xf32>
    %cst_25 = arith.constant dense<0.000000e+00> : vector<8x128xf32>
    %47 = tpu.matmul %45, %46, %cst_25 {dimension_numbers = #tpu.dot_dimension_numbers<[1], [0], [0], [1], [0, 0, 1, 1], [], []>} : vector<8x128xf32>, vector<128x128xf32>, vector<8x128xf32> -> vector<8x128xf32>
    %48 = vector.extract_strided_slice %47 {offsets = [0, 0], sizes = [8, 1], strides = [1, 1]} : vector<8x128xf32> to vector<8x1xf32>
    %49 = vector.extract_strided_slice %47 {offsets = [0, 1], sizes = [8, 1], strides = [1, 1]} : vector<8x128xf32> to vector<8x1xf32>
    %50 = tpu.iota {dimensions = array<i32: 1>} : vector<8x128xi32>
    %c25_i32 = arith.constant 25 : i32
    %51 = vector.broadcast %c25_i32 : i32 to vector<8x128xi32>
    %52 = arith.cmpi slt, %50, %51 : vector<8x128xi32>
    %cst_26 = arith.constant 0xFF800000 : f32
    %53 = vector.broadcast %cst_26 : f32 to vector<8x128xf32>
    %54 = arith.select %52, %39, %53 : vector<8x128xi1>, vector<8x128xf32>
    %cst_27 = arith.constant dense<0xFF800000> : vector<8xf32>
    %55 = vector.multi_reduction <maximumf>, %54, %cst_27 [1] : vector<8x128xf32> to vector<8xf32>
    %56 = vector.shape_cast %55 : vector<8xf32> to vector<8x1xf32>
    %cst_28 = arith.constant 0x7F800000 : f32
    %57 = vector.broadcast %cst_28 : f32 to vector<8x128xf32>
    %58 = arith.select %52, %39, %57 : vector<8x128xi1>, vector<8x128xf32>
    %cst_29 = arith.constant dense<0x7F800000> : vector<8xf32>
    %59 = vector.multi_reduction <minimumf>, %58, %cst_29 [1] : vector<8x128xf32> to vector<8xf32>
    %60 = vector.shape_cast %59 : vector<8xf32> to vector<8x1xf32>
    %61 = arith.maximumf %48, %56 : vector<8x1xf32>
    %62 = arith.minimumf %49, %60 : vector<8x1xf32>
    %c0_30 = arith.constant 0 : index
    %c0_31 = arith.constant 0 : index
    %63 = vector.load %arg6[%c0_30, %c0_31] : memref<1x64xf32, #tpu.memory_space<vmem>>, vector<1x64xf32>
    %64 = vector.shape_cast %63 : vector<1x64xf32> to vector<1x64xf32>
    %65 = vector.broadcast %64 : vector<1x64xf32> to vector<8x64xf32>
    %cst_32 = arith.constant 0.000000e+00 : f32
    %66 = vector.broadcast %cst_32 : f32 to vector<8x64xf32>
    %67 = arith.cmpf oge, %65, %66 : vector<8x64xf32>
    %68 = vector.shape_cast %61 : vector<8x1xf32> to vector<8x1xf32>
    %69 = vector.broadcast %68 : vector<8x1xf32> to vector<8x64xf32>
    %70 = vector.shape_cast %62 : vector<8x1xf32> to vector<8x1xf32>
    %71 = vector.broadcast %70 : vector<8x1xf32> to vector<8x64xf32>
    %72 = arith.select %67, %69, %71 : vector<8x64xi1>, vector<8x64xf32>
    %73 = arith.mulf %72, %65 : vector<8x64xf32>
    %c0_33 = arith.constant 0 : index
    %c0_34 = arith.constant 0 : index
    %74 = vector.load %arg7[%c0_33, %c0_34] : memref<1x64xf32, #tpu.memory_space<vmem>>, vector<1x64xf32>
    %75 = vector.broadcast %74 : vector<1x64xf32> to vector<8x64xf32>
    %76 = arith.addf %73, %75 : vector<8x64xf32>
    %c0_35 = arith.constant 0 : index
    %c0_36 = arith.constant 0 : index
    %77 = vector.load %arg8[%c0_35, %c0_36] : memref<64x128xf32, #tpu.memory_space<vmem>>, vector<64x128xf32>
    %cst_37 = arith.constant dense<0.000000e+00> : vector<8x128xf32>
    %78 = tpu.matmul %76, %77, %cst_37 {dimension_numbers = #tpu.dot_dimension_numbers<[1], [0], [0], [1], [0, 0, 1, 1], [], []>} : vector<8x64xf32>, vector<64x128xf32>, vector<8x128xf32> -> vector<8x128xf32>
    %c0_38 = arith.constant 0 : index
    %c0_39 = arith.constant 0 : index
    %79 = vector.load %arg9[%c0_38, %c0_39] : memref<1x128xf32, #tpu.memory_space<vmem>>, vector<1x128xf32>
    %80 = vector.broadcast %79 : vector<1x128xf32> to vector<8x128xf32>
    %81 = arith.addf %78, %80 : vector<8x128xf32>
    %cst_40 = arith.constant dense<0xFF800000> : vector<8xf32>
    %82 = vector.multi_reduction <maximumf>, %81, %cst_40 [1] : vector<8x128xf32> to vector<8xf32>
    %83 = vector.shape_cast %82 : vector<8xf32> to vector<8x1xf32>
    %84 = vector.broadcast %83 : vector<8x1xf32> to vector<8x128xf32>
    %85 = arith.cmpf oeq, %81, %84 : vector<8x128xf32>
    %c128_i32 = arith.constant 128 : i32
    %86 = vector.broadcast %c128_i32 : i32 to vector<8x128xi32>
    %87 = arith.select %85, %50, %86 : vector<8x128xi1>, vector<8x128xi32>
    %cst_41 = arith.constant dense<2147483647> : vector<8xi32>
    %88 = vector.multi_reduction <minsi>, %87, %cst_41 [1] : vector<8x128xi32> to vector<8xi32>
    %89 = vector.shape_cast %88 : vector<8xi32> to vector<8x1xi32>
    %90 = arith.sitofp %89 : vector<8x1xi32> to vector<8x1xf32>
    %c5_i32 = arith.constant 5 : i32
    %91 = vector.broadcast %c5_i32 : i32 to vector<8x128xi32>
    %92 = arith.cmpi eq, %50, %91 : vector<8x128xi32>
    %93 = vector.shape_cast %83 : vector<8x1xf32> to vector<8x1xf32>
    %94 = vector.broadcast %93 : vector<8x1xf32> to vector<8x128xf32>
    %95 = arith.select %92, %94, %81 : vector<8x128xi1>, vector<8x128xf32>
    %c6_i32 = arith.constant 6 : i32
    %96 = vector.broadcast %c6_i32 : i32 to vector<8x128xi32>
    %97 = arith.cmpi eq, %50, %96 : vector<8x128xi32>
    %98 = vector.shape_cast %90 : vector<8x1xf32> to vector<8x1xf32>
    %99 = vector.broadcast %98 : vector<8x1xf32> to vector<8x128xf32>
    %100 = arith.select %97, %99, %95 : vector<8x128xi1>, vector<8x128xf32>
    %c0_42 = arith.constant 0 : index
    %c0_43 = arith.constant 0 : index
    %101 = vector.load %arg10[%c0_42, %c0_43] : memref<8x128xf32, #tpu.memory_space<vmem>>, vector<8x128xf32>
    tpu.vector_store %arg10[%c0_42, %c0_43], %100 {strides = array<i32>} : memref<8x128xf32, #tpu.memory_space<vmem>>, vector<8x128xf32>,
    return
  }
  func.func @transform_0(%arg0: i32) -> (i32, i32, i32) {
    %c0_i32 = arith.constant 0 : i32
    %c0_i32_0 = arith.constant 0 : i32
    %c0_i32_1 = arith.constant 0 : i32
    return %c0_i32, %arg0, %c0_i32_0 : i32, i32, i32
  }
  func.func @transform_1(%arg0: i32) -> (i32, i32) {
    %c0_i32 = arith.constant 0 : i32
    %c0_i32_0 = arith.constant 0 : i32
    return %arg0, %c0_i32 : i32, i32
  }
  func.func @transform_2(%arg0: i32) -> (i32, i32, i32) {
    %c0_i32 = arith.constant 0 : i32
    %c0_i32_0 = arith.constant 0 : i32
    %c0_i32_1 = arith.constant 0 : i32
    %c0_i32_2 = arith.constant 0 : i32
    return %c0_i32, %c0_i32_0, %c0_i32_1 : i32, i32, i32
  }
  func.func @transform_3(%arg0: i32) -> (i32, i32) {
    %c0_i32 = arith.constant 0 : i32
    %c0_i32_0 = arith.constant 0 : i32
    %c0_i32_1 = arith.constant 0 : i32
    return %c0_i32, %c0_i32_0 : i32, i32
  }
  func.func @transform_4(%arg0: i32) -> (i32, i32) {
    %c0_i32 = arith.constant 0 : i32
    %c0_i32_0 = arith.constant 0 : i32
    %c0_i32_1 = arith.constant 0 : i32
    return %c0_i32, %c0_i32_0 : i32, i32
  }
  func.func @transform_5(%arg0: i32) -> (i32, i32) {
    %c0_i32 = arith.constant 0 : i32
    %c0_i32_0 = arith.constant 0 : i32
    %c0_i32_1 = arith.constant 0 : i32
    return %c0_i32, %c0_i32_0 : i32, i32
  }
  func.func @transform_6(%arg0: i32) -> (i32, i32) {
    %c0_i32 = arith.constant 0 : i32
    %c0_i32_0 = arith.constant 0 : i32
    %c0_i32_1 = arith.constant 0 : i32
    return %c0_i32, %c0_i32_0 : i32, i32
  }
  func.func @transform_7(%arg0: i32) -> (i32, i32) {
    %c0_i32 = arith.constant 0 : i32
    %c0_i32_0 = arith.constant 0 : i32
    %c0_i32_1 = arith.constant 0 : i32
    return %c0_i32, %c0_i32_0 : i32, i32
  }
  func.func @transform_8(%arg0: i32) -> (i32, i32) {
    %c0_i32 = arith.constant 0 : i32
    %c0_i32_0 = arith.constant 0 : i32
    %c0_i32_1 = arith.constant 0 : i32
    return %c0_i32, %c0_i32_0 : i32, i32
  }
  func.func @transform_9(%arg0: i32) -> (i32, i32) {
    %c0_i32 = arith.constant 0 : i32
    %c0_i32_0 = arith.constant 0 : i32
    return %arg0, %c0_i32 : i32, i32
  }
}

</mosaic_0001>

<llo_original>
// kernel: ner_forward.1
$region0: #{ner_forward.1}
  #allocation0 [shape = 'u32[]', space=smem, size = 0x4, offset = 0x4, fixed_abs, tag = 'smem constant byte address 0x4 - core index']
  #allocation1 [shape = 'u32[144,128]{1,0:T(1,128)}', space=vmem, size = 0x12000, scoped, tag = 'internal scratch']
  %s0 = inlined_call_operand.vmem [shape: s32[3,256,1], index: 0, kind: input, shape index: {}]
  %s1 = inlined_call_operand.vmem [shape: s32[16,1], index: 1, kind: input, shape index: {}]
  %s2 = inlined_call_operand.vmem [shape: f32[3,128,128], index: 2, kind: input, shape index: {}]
  %s3 = inlined_call_operand.vmem [shape: f32[1,128], index: 3, kind: input, shape index: {}]
  %s4 = inlined_call_operand.vmem [shape: f32[128,128], index: 4, kind: input, shape index: {}]
  %s5 = inlined_call_operand.vmem [shape: f32[1,64], index: 5, kind: input, shape index: {}]
  %s6 = inlined_call_operand.vmem [shape: f32[1,64], index: 6, kind: input, shape index: {}]
  %s7 = inlined_call_operand.vmem [shape: f32[64,128], index: 7, kind: input, shape index: {}]
  %s8 = inlined_call_operand.vmem [shape: f32[1,128], index: 8, kind: input, shape index: {}]
  %s9 = inlined_call_operand.vmem [shape: f32[16,128], index: 9, kind: output, shape index: {}]
  %s10 = sld [smem:[#allocation0]]
  $region107: #{ner_forward.1} parent=0
    _
  %s12 = ssub.s32 1, %s10
  %s13 = scalar_select 0, %s12, %s10
  $region1: #{ner_forward.1} parent=0
    #allocation2 [shape = 'u8[393216]{0}', space=vmem, size = 0x60000, scoped, tag = 'input window, operand 0']
    loop: start=0, step=1, limit=4
    $region2: #{ner_forward.1} parent=1 // loop_pre_header
      _
    $region3: #{ner_forward.1} parent=1 // loop_header
      %s15 = sphi 0, %s19
      %p16 = scmp.ge.s32.totalorder %s15, 4
      %s25 = sphi 0, %s27
      %s28 = sphi 0, %s25
      %s29 = sphi 0, %s28
      %s45 = sphi 0, %s29
      %s51 = sphi 0, %s53
      %s54 = sphi 0, %s51
      %s55 = sphi 0, %s54
      %s71 = sphi 0, %s55
      %s75 = sphi 0, %s75
      %s77 = sphi 0, %s75
      %s78 = sphi 0, %s77
      %s92 = sphi 0, %s78
      %s96 = sphi 0, %s96
      %s98 = sphi 0, %s96
      %s99 = sphi 0, %s98
      %s113 = sphi 0, %s99
      %s117 = sphi 0, %s117
      %s119 = sphi 0, %s117
      %s120 = sphi 0, %s119
      %s134 = sphi 0, %s120
      %s138 = sphi 0, %s138
      %s140 = sphi 0, %s138
      %s141 = sphi 0, %s140
      %s155 = sphi 0, %s141
      %s159 = sphi 0, %s159
      %s161 = sphi 0, %s159
      %s162 = sphi 0, %s161
      %s176 = sphi 0, %s162
      %s180 = sphi 0, %s180
      %s182 = sphi 0, %s180
      %s183 = sphi 0, %s182
      %s197 = sphi 0, %s183
      %s201 = sphi 0, %s201
      %s203 = sphi 0, %s201
      %s204 = sphi 0, %s203
      %s218 = sphi 0, %s204
      %s224 = sphi 0, %s226
      %s227 = sphi 0, %s224
      %s228 = sphi 0, %s227
      %s244 = sphi 0, %s228
    $region4: #{ner_forward.1} parent=1 // loop_header_branch
      %18 = sbr.rel (%p16) target = $region8
    $region5: #{ner_forward.1} parent=1 // loop_body
      %s20 = ssub.s32 %s15, 1
      %s21 = ssub.s32 %s15, 2
      %s22 = sadd.s32 %s15, 1
      %s23 = ssub.s32 %s15, %s22
      %p24 = scmp.eq.s32.totalorder %s23, 0
      %s26 = sadd.s32 %s25, 1
      %s27 = scalar_select %p24, %s25, %s26
      %p30 = pneg %p24
      %p31 = scmp.eq.s32.totalorder %s15, 1
      %p32 = por %p30, %p31
      %p33 = scmp.ne.s32.totalorder %s25, %s28
      %p34 = scmp.eq.s32.totalorder %s15, 0
      %p35 = por %p33, %p34
      %p36 = scmp.ne.s32.totalorder %s25, %s28
      %p37 = scmp.eq.s32.totalorder %s20, 1
      %p38 = por %p36, %p37
      %p39 = scmp.ne.s32.totalorder %s28, %s29
      %p40 = scmp.eq.s32.totalorder %s20, 0
      %p41 = por %p39, %p40
      %p42 = scmp.ne.s32.totalorder %s28, %s29
      %p43 = scmp.eq.s32.totalorder %s21, 1
      %p44 = por %p42, %p43
      %p46 = scmp.ne.s32.totalorder %s29, %s45
      %p47 = scmp.eq.s32.totalorder %s21, 0
      %p48 = por %p46, %p47
      %s49 = ssub.s32 %s15, %s22
      %p50 = scmp.eq.s32.totalorder %s49, 0
      %s52 = sadd.s32 %s51, 1
      %s53 = scalar_select %p50, %s51, %s52
      %p56 = pneg %p50
      %p57 = scmp.eq.s32.totalorder %s15, 1
      %p58 = por %p56, %p57
      %p59 = scmp.ne.s32.totalorder %s51, %s54
      %p60 = scmp.eq.s32.totalorder %s15, 0
      %p61 = por %p59, %p60
      %p62 = scmp.ne.s32.totalorder %s51, %s54
      %p63 = scmp.eq.s32.totalorder %s20, 1
      %p64 = por %p62, %p63
      %p65 = scmp.ne.s32.totalorder %s54, %s55
      %p66 = scmp.eq.s32.totalorder %s20, 0
      %p67 = por %p65, %p66
      %p68 = scmp.ne.s32.totalorder %s54, %s55
      %p69 = scmp.eq.s32.totalorder %s21, 1
      %p70 = por %p68, %p69
      %p72 = scmp.ne.s32.totalorder %s55, %s71
      %p73 = scmp.eq.s32.totalorder %s21, 0
      %p74 = por %p72, %p73
      %s76 = sadd.s32 %s75, 1
      %p79 = scmp.eq.s32.totalorder %s15, 1
      %p80 = scmp.ne.s32.totalorder %s75, %s77
      %p81 = scmp.eq.s32.totalorder %s15, 0
      %p82 = por %p80, %p81
      %p83 = scmp.ne.s32.totalorder %s75, %s77
      %p84 = scmp.eq.s32.totalorder %s20, 1
      %p85 = por %p83, %p84
      %p86 = scmp.ne.s32.totalorder %s77, %s78
      %p87 = scmp.eq.s32.totalorder %s20, 0
      %p88 = por %p86, %p87
      %p89 = scmp.ne.s32.totalorder %s77, %s78
      %p90 = scmp.eq.s32.totalorder %s21, 1
      %p91 = por %p89, %p90
      %p93 = scmp.ne.s32.totalorder %s78, %s92
      %p94 = scmp.eq.s32.totalorder %s21, 0
      %p95 = por %p93, %p94
      %s97 = sadd.s32 %s96, 1
      %p100 = scmp.eq.s32.totalorder %s15, 1
      %p101 = scmp.ne.s32.totalorder %s96, %s98
      %p102 = scmp.eq.s32.totalorder %s15, 0
      %p103 = por %p101, %p102
      %p104 = scmp.ne.s32.totalorder %s96, %s98
      %p105 = scmp.eq.s32.totalorder %s20, 1
      %p106 = por %p104, %p105
      %p107 = scmp.ne.s32.totalorder %s98, %s99
      %p108 = scmp.eq.s32.totalorder %s20, 0
      %p109 = por %p107, %p108
      %p110 = scmp.ne.s32.totalorder %s98, %s99
      %p111 = scmp.eq.s32.totalorder %s21, 1
      %p112 = por %p110, %p111
      %p114 = scmp.ne.s32.totalorder %s99, %s113
      %p115 = scmp.eq.s32.totalorder %s21, 0
      %p116 = por %p114, %p115
      %s118 = sadd.s32 %s117, 1
      %p121 = scmp.eq.s32.totalorder %s15, 1
      %p122 = scmp.ne.s32.totalorder %s117, %s119
      %p123 = scmp.eq.s32.totalorder %s15, 0
      %p124 = por %p122, %p123
      %p125 = scmp.ne.s32.totalorder %s117, %s119
      %p126 = scmp.eq.s32.totalorder %s20, 1
      %p127 = por %p125, %p126
      %p128 = scmp.ne.s32.totalorder %s119, %s120
      %p129 = scmp.eq.s32.totalorder %s20, 0
      %p130 = por %p128, %p129
      %p131 = scmp.ne.s32.totalorder %s119, %s120
      %p132 = scmp.eq.s32.totalorder %s21, 1
      %p133 = por %p131, %p132
      %p135 = scmp.ne.s32.totalorder %s120, %s134
      %p136 = scmp.eq.s32.totalorder %s21, 0
      %p137 = por %p135, %p136
      %s139 = sadd.s32 %s138, 1
      %p142 = scmp.eq.s32.totalorder %s15, 1
      %p143 = scmp.ne.s32.totalorder %s138, %s140
      %p144 = scmp.eq.s32.totalorder %s15, 0
      %p145 = por %p143, %p144
      %p146 = scmp.ne.s32.totalorder %s138, %s140
      %p147 = scmp.eq.s32.totalorder %s20, 1
      %p148 = por %p146, %p147
      %p149 = scmp.ne.s32.totalorder %s140, %s141
      %p150 = scmp.eq.s32.totalorder %s20, 0
      %p151 = por %p149, %p150
      %p152 = scmp.ne.s32.totalorder %s140, %s141
      %p153 = scmp.eq.s32.totalorder %s21, 1
      %p154 = por %p152, %p153
      %p156 = scmp.ne.s32.totalorder %s141, %s155
      %p157 = scmp.eq.s32.totalorder %s21, 0
      %p158 = por %p156, %p157
      %s160 = sadd.s32 %s159, 1
      %p163 = scmp.eq.s32.totalorder %s15, 1
      %p164 = scmp.ne.s32.totalorder %s159, %s161
      %p165 = scmp.eq.s32.totalorder %s15, 0
      %p166 = por %p164, %p165
      %p167 = scmp.ne.s32.totalorder %s159, %s161
      %p168 = scmp.eq.s32.totalorder %s20, 1
      %p169 = por %p167, %p168
      %p170 = scmp.ne.s32.totalorder %s161, %s162
      %p171 = scmp.eq.s32.totalorder %s20, 0
      %p172 = por %p170, %p171
      %p173 = scmp.ne.s32.totalorder %s161, %s162
      %p174 = scmp.eq.s32.totalorder %s21, 1
      %p175 = por %p173, %p174
      %p177 = scmp.ne.s32.totalorder %s162, %s176
      %p178 = scmp.eq.s32.totalorder %s21, 0
      %p179 = por %p177, %p178
      %s181 = sadd.s32 %s180, 1
      %p184 = scmp.eq.s32.totalorder %s15, 1
      %p185 = scmp.ne.s32.totalorder %s180, %s182
      %p186 = scmp.eq.s32.totalorder %s15, 0
      %p187 = por %p185, %p186
      %p188 = scmp.ne.s32.totalorder %s180, %s182
      %p189 = scmp.eq.s32.totalorder %s20, 1
      %p190 = por %p188, %p189
      %p191 = scmp.ne.s32.totalorder %s182, %s183
      %p192 = scmp.eq.s32.totalorder %s20, 0
      %p193 = por %p191, %p192
      %p194 = scmp.ne.s32.totalorder %s182, %s183
      %p195 = scmp.eq.s32.totalorder %s21, 1
      %p196 = por %p194, %p195
      %p198 = scmp.ne.s32.totalorder %s183, %s197
      %p199 = scmp.eq.s32.totalorder %s21, 0
      %p200 = por %p198, %p199
      %s202 = sadd.s32 %s201, 1
      %p205 = scmp.eq.s32.totalorder %s15, 1
      %p206 = scmp.ne.s32.totalorder %s201, %s203
      %p207 = scmp.eq.s32.totalorder %s15, 0
      %p208 = por %p206, %p207
      %p209 = scmp.ne.s32.totalorder %s201, %s203
      %p210 = scmp.eq.s32.totalorder %s20, 1
      %p211 = por %p209, %p210
      %p212 = scmp.ne.s32.totalorder %s203, %s204
      %p213 = scmp.eq.s32.totalorder %s20, 0
      %p214 = por %p212, %p213
      %p215 = scmp.ne.s32.totalorder %s203, %s204
      %p216 = scmp.eq.s32.totalorder %s21, 1
      %p217 = por %p215, %p216
      %p219 = scmp.ne.s32.totalorder %s204, %s218
      %p220 = scmp.eq.s32.totalorder %s21, 0
      %p221 = por %p219, %p220
      %s222 = ssub.s32 %s15, %s22
      %p223 = scmp.eq.s32.totalorder %s222, 0
      %s225 = sadd.s32 %s224, 1
      %s226 = scalar_select %p223, %s224, %s225
      %p229 = pneg %p223
      %p230 = scmp.eq.s32.totalorder %s15, 1
      %p231 = por %p229, %p230
      %p232 = scmp.ne.s32.totalorder %s224, %s227
      %p233 = scmp.eq.s32.totalorder %s15, 0
      %p234 = por %p232, %p233
      %p235 = scmp.ne.s32.totalorder %s224, %s227
      %p236 = scmp.eq.s32.totalorder %s20, 1
      %p237 = por %p235, %p236
      %p238 = scmp.ne.s32.totalorder %s227, %s228
      %p239 = scmp.eq.s32.totalorder %s20, 0
      %p240 = por %p238, %p239
      %p241 = scmp.ne.s32.totalorder %s227, %s228
      %p242 = scmp.eq.s32.totalorder %s21, 1
      %p243 = por %p241, %p242
      %p245 = scmp.ne.s32.totalorder %s228, %s244
      %p246 = scmp.eq.s32.totalorder %s21, 0
      %p247 = por %p245, %p246
      %p248 = scmp.le.s32.totalorder 1, %s15
      %p249 = scmp.lt.s32.totalorder %s15, 3
      %p250 = pnand %p248, %p249
      %p251 = pneg %p250
      // Predicated region
      $region9: #{ner_forward.1} parent=5 // pred_check
        _
      $region10: #{ner_forward.1} parent=5 // pred_check_branch
        %253 = sbr.rel (%p250) target = $region12
      $region11: #{ner_forward.1} parent=5 // pred_region
        %s254 = ssub.s32 %s15, 1
        // Predicated region
        $region13: #{ner_forward.1} parent=11 // pred_check
          %p255 = pneg %p88
        $region14: #{ner_forward.1} parent=11 // pred_check_branch
          %257 = sbr.rel (%p255) target = $region16
        $region15: #{ner_forward.1} parent=11 // pred_region
          _
        $region16: #{ner_forward.1} parent=11 // pred_fallthru
          _
        // Predicated region
        $region17: #{ner_forward.1} parent=11 // pred_check
          %p258 = pneg %p109
        $region18: #{ner_forward.1} parent=11 // pred_check_branch
          %260 = sbr.rel (%p258) target = $region20
        $region19: #{ner_forward.1} parent=11 // pred_region
          _
        $region20: #{ner_forward.1} parent=11 // pred_fallthru
          _
        // Predicated region
        $region21: #{ner_forward.1} parent=11 // pred_check
          %p261 = pneg %p130
        $region22: #{ner_forward.1} parent=11 // pred_check_branch
          %263 = sbr.rel (%p261) target = $region24
        $region23: #{ner_forward.1} parent=11 // pred_region
          _
        $region24: #{ner_forward.1} parent=11 // pred_fallthru
          _
        // Predicated region
        $region25: #{ner_forward.1} parent=11 // pred_check
          %p264 = pneg %p151
        $region26: #{ner_forward.1} parent=11 // pred_check_branch
          %266 = sbr.rel (%p264) target = $region28
        $region27: #{ner_forward.1} parent=11 // pred_region
          _
        $region28: #{ner_forward.1} parent=11 // pred_fallthru
          _
        // Predicated region
        $region29: #{ner_forward.1} parent=11 // pred_check
          %p267 = pneg %p172
        $region30: #{ner_forward.1} parent=11 // pred_check_branch
          %269 = sbr.rel (%p267) target = $region32
        $region31: #{ner_forward.1} parent=11 // pred_region
          _
        $region32: #{ner_forward.1} parent=11 // pred_fallthru
          _
        // Predicated region
        $region33: #{ner_forward.1} parent=11 // pred_check
          %p270 = pneg %p193
        $region34: #{ner_forward.1} parent=11 // pred_check_branch
          %272 = sbr.rel (%p270) target = $region36
        $region35: #{ner_forward.1} parent=11 // pred_region
          _
        $region36: #{ner_forward.1} parent=11 // pred_fallthru
          _
        // Predicated region
        $region37: #{ner_forward.1} parent=11 // pred_check
          %p273 = pneg %p214
        $region38: #{ner_forward.1} parent=11 // pred_check_branch
          %275 = sbr.rel (%p273) target = $region40
        $region39: #{ner_forward.1} parent=11 // pred_region
          _
        $region40: #{ner_forward.1} parent=11 // pred_fallthru
          _
      $region12: #{ner_forward.1} parent=5 // pred_fallthru
        _
      %p276 = scmp.lt.s32.totalorder %s15, 2
      // Predicated region
      $region41: #{ner_forward.1} parent=5 // pred_check
        %p277 = pneg %p276
      $region42: #{ner_forward.1} parent=5 // pred_check_branch
        %279 = sbr.rel (%p277) target = $region44
      $region43: #{ner_forward.1} parent=5 // pred_region
        // Predicated region
        $region45: #{ner_forward.1} parent=43 // pred_check
          %p280 = pneg %p35
        $region46: #{ner_forward.1} parent=43 // pred_check_branch
          %282 = sbr.rel (%p280) target = $region48
        $region47: #{ner_forward.1} parent=43 // pred_region
          %s283 = sand.u32 %s25, 1
          %s284 = sand.u32 %s25, 1
          %s285 = smul.addr %s284, 384
          %s286 = scalar_lea.vmem [#allocation2], %s285
          %s287 = smul.u32 16, %s15
          %s288 = smul.addr %s287, 8
          %s289 = scalar_lea.vmem %s0, %s288
          // Predicated region
          $region49: #{ner_forward.1} parent=47 // pred_check
            _
          $region50: #{ner_forward.1} parent=47 // pred_check_branch
            %291 = sbr.rel (0) target = $region52
          $region51: #{ner_forward.1} parent=47 // pred_region
            // Predicated region
            $region53: #{ner_forward.1} parent=51 // pred_check
              _
            $region54: #{ner_forward.1} parent=51 // pred_check_branch
              %293 = sbr.rel (0) target = $region56
            $region55: #{ner_forward.1} parent=51 // pred_region
              // Predicated region
              $region68: #{ner_forward.1} parent=55 // pred_check
                _
              $region69: #{ner_forward.1} parent=55 // pred_check_branch
                %402 = sbr.rel (0) target = $region71
              $region70: #{ner_forward.1} parent=55 // pred_region
                loop: start=0, step=1, limit=1
                $region72: #{ner_forward.1} parent=70 // loop_pre_header
                  _
                $region73: #{ner_forward.1} parent=70 // loop_header
                  %s404 = sphi 0, %s408
                  %p405 = scmp.ge.s32.totalorder %s404, 1
                  %s409 = sphi %s289, %s289
                  %s410 = sphi %s286, %s286
                $region74: #{ner_forward.1} parent=70 // loop_header_branch
                  %407 = sbr.rel (%p405) target = $region78
                $region75: #{ner_forward.1} parent=70 // loop_body
                  %v411 = vld [vmem:[%s409] sm:$0xff]
                  %412 = vst [vmem:[%s410] sm:$0xff] %v411
                  %v413 = vld [vmem:[%s409 + $0x8] sm:$0xff]
                  %414 = vst [vmem:[%s410 + $0x8] sm:$0xff] %v413
                  %v415 = vld [vmem:[%s409 + $0x10] sm:$0xff]
                  %416 = vst [vmem:[%s410 + $0x10] sm:$0xff] %v415
                  %v417 = vld [vmem:[%s409 + $0x18] sm:$0xff]
                  %418 = vst [vmem:[%s410 + $0x18] sm:$0xff] %v417
                  %v419 = vld [vmem:[%s409 + $0x20] sm:$0xff]
                  %420 = vst [vmem:[%s410 + $0x20] sm:$0xff] %v419
                  %v421 = vld [vmem:[%s409 + $0x28] sm:$0xff]
                  %422 = vst [vmem:[%s410 + $0x28] sm:$0xff] %v421
                  %v423 = vld [vmem:[%s409 + $0x30] sm:$0xff]
                  %424 = vst [vmem:[%s410 + $0x30] sm:$0xff] %v423
                  %v425 = vld [vmem:[%s409 + $0x38] sm:$0xff]
                  %426 = vst [vmem:[%s410 + $0x38] sm:$0xff] %v425
                  %v427 = vld [vmem:[%s409 + $0x40] sm:$0xff]
                  %428 = vst [vmem:[%s410 + $0x40] sm:$0xff] %v427
                  %v429 = vld [vmem:[%s409 + $0x48] sm:$0xff]
                  %430 = vst [vmem:[%s410 + $0x48] sm:$0xff] %v429
                  %v431 = vld [vmem:[%s409 + $0x50] sm:$0xff]
                  %432 = vst [vmem:[%s410 + $0x50] sm:$0xff] %v431
                  %v433 = vld [vmem:[%s409 + $0x58] sm:$0xff]
                  %434 = vst [vmem:[%s410 + $0x58] sm:$0xff] %v433
                  %v435 = vld [vmem:[%s409 + $0x60] sm:$0xff]
                  %436 = vst [vmem:[%s410 + $0x60] sm:$0xff] %v435
                  %v437 = vld [vmem:[%s409 + $0x68] sm:$0xff]
                  %438 = vst [vmem:[%s410 + $0x68] sm:$0xff] %v437
                  %v439 = vld [vmem:[%s409 + $0x70] sm:$0xff]
                  %440 = vst [vmem:[%s410 + $0x70] sm:$0xff] %v439
                  %v441 = vld [vmem:[%s409 + $0x78] sm:$0xff]
                  %442 = vst [vmem:[%s410 + $0x78] sm:$0xff] %v441
                  %v443 = vld [vmem:[%s409 + $0x100] sm:$0xff]
                  %444 = vst [vmem:[%s410 + $0x80] sm:$0xff] %v443
                  %v445 = vld [vmem:[%s409 + $0x108] sm:$0xff]
                  %446 = vst [vmem:[%s410 + $0x88] sm:$0xff] %v445
                  %v447 = vld [vmem:[%s409 + $0x110] sm:$0xff]
                  %448 = vst [vmem:[%s410 + $0x90] sm:$0xff] %v447
                  %v449 = vld [vmem:[%s409 + $0x118] sm:$0xff]
                  %450 = vst [vmem:[%s410 + $0x98] sm:$0xff] %v449
                  %v451 = vld [vmem:[%s409 + $0x120] sm:$0xff]
                  %452 = vst [vmem:[%s410 + $0xa0] sm:$0xff] %v451
                  %v453 = vld [vmem:[%s409 + $0x128] sm:$0xff]
                  %454 = vst [vmem:[%s410 + $0xa8] sm:$0xff] %v453
                  %v455 = vld [vmem:[%s409 + $0x130] sm:$0xff]
                  %456 = vst [vmem:[%s410 + $0xb0] sm:$0xff] %v455
                  %v457 = vld [vmem:[%s409 + $0x138] sm:$0xff]
                  %458 = vst [vmem:[%s410 + $0xb8] sm:$0xff] %v457
                  %v459 = vld [vmem:[%s409 + $0x140] sm:$0xff]
                  %460 = vst [vmem:[%s410 + $0xc0] sm:$0xff] %v459
                  %v461 = vld [vmem:[%s409 + $0x148] sm:$0xff]
                  %462 = vst [vmem:[%s410 + $0xc8] sm:$0xff] %v461
                  %v463 = vld [vmem:[%s409 + $0x150] sm:$0xff]
                  %464 = vst [vmem:[%s410 + $0xd0] sm:$0xff] %v463
                  %v465 = vld [vmem:[%s409 + $0x158] sm:$0xff]
                  %466 = vst [vmem:[%s410 + $0xd8] sm:$0xff] %v465
                  %v467 = vld [vmem:[%s409 + $0x160] sm:$0xff]
                  %468 = vst [vmem:[%s410 + $0xe0] sm:$0xff] %v467
                  %v469 = vld [vmem:[%s409 + $0x168] sm:$0xff]
                  %470 = vst [vmem:[%s410 + $0xe8] sm:$0xff] %v469
                  %v471 = vld [vmem:[%s409 + $0x170] sm:$0xff]
                  %472 = vst [vmem:[%s410 + $0xf0] sm:$0xff] %v471
                  %v473 = vld [vmem:[%s409 + $0x178] sm:$0xff]
                  %474 = vst [vmem:[%s410 + $0xf8] sm:$0xff] %v473
                  %v475 = vld [vmem:[%s409 + $0x200] sm:$0xff]
                  %476 = vst [vmem:[%s410 + $0x100] sm:$0xff] %v475
                  %v477 = vld [vmem:[%s409 + $0x208] sm:$0xff]
                  %478 = vst [vmem:[%s410 + $0x108] sm:$0xff] %v477
                  %v479 = vld [vmem:[%s409 + $0x210] sm:$0xff]
                  %480 = vst [vmem:[%s410 + $0x110] sm:$0xff] %v479
                  %v481 = vld [vmem:[%s409 + $0x218] sm:$0xff]
                  %482 = vst [vmem:[%s410 + $0x118] sm:$0xff] %v481
                  %v483 = vld [vmem:[%s409 + $0x220] sm:$0xff]
                  %484 = vst [vmem:[%s410 + $0x120] sm:$0xff] %v483
                  %v485 = vld [vmem:[%s409 + $0x228] sm:$0xff]
                  %486 = vst [vmem:[%s410 + $0x128] sm:$0xff] %v485
                  %v487 = vld [vmem:[%s409 + $0x230] sm:$0xff]
                  %488 = vst [vmem:[%s410 + $0x130] sm:$0xff] %v487
                  %v489 = vld [vmem:[%s409 + $0x238] sm:$0xff]
                  %490 = vst [vmem:[%s410 + $0x138] sm:$0xff] %v489
                  %v491 = vld [vmem:[%s409 + $0x240] sm:$0xff]
                  %492 = vst [vmem:[%s410 + $0x140] sm:$0xff] %v491
                  %v493 = vld [vmem:[%s409 + $0x248] sm:$0xff]
                  %494 = vst [vmem:[%s410 + $0x148] sm:$0xff] %v493
                  %v495 = vld [vmem:[%s409 + $0x250] sm:$0xff]
                  %496 = vst [vmem:[%s410 + $0x150] sm:$0xff] %v495
                  %v497 = vld [vmem:[%s409 + $0x258] sm:$0xff]
                  %498 = vst [vmem:[%s410 + $0x158] sm:$0xff] %v497
                  %v499 = vld [vmem:[%s409 + $0x260] sm:$0xff]
                  %500 = vst [vmem:[%s410 + $0x160] sm:$0xff] %v499
                  %v501 = vld [vmem:[%s409 + $0x268] sm:$0xff]
                  %502 = vst [vmem:[%s410 + $0x168] sm:$0xff] %v501
                  %v503 = vld [vmem:[%s409 + $0x270] sm:$0xff]
                  %504 = vst [vmem:[%s410 + $0x170] sm:$0xff] %v503
                  %v505 = vld [vmem:[%s409 + $0x278] sm:$0xff]
                  %506 = vst [vmem:[%s410 + $0x178] sm:$0xff] %v505
                $region76: #{ner_forward.1} parent=70 // loop_footer
                  %s408 = sadd.s32 1, %s404
                $region77: #{ner_forward.1} parent=70 // loop_footer_branch
                  %403 = sbr.rel target = $region73
                $region78: #{ner_forward.1} parent=70 // loop_exit
                  _
              $region71: #{ner_forward.1} parent=55 // pred_fallthru
                _
              // Predicated region
              $region79: #{ner_forward.1} parent=55 // pred_check
                _
              $region80: #{ner_forward.1} parent=55 // pred_check_branch
                %508 = sbr.rel target = $region82
              $region81: #{ner_forward.1} parent=55 // pred_region
                _
              $region82: #{ner_forward.1} parent=55 // pred_fallthru
                _
            $region56: #{ner_forward.1} parent=51 // pred_fallthru
              _
            // Predicated region
            $region57: #{ner_forward.1} parent=51 // pred_check
              _
            $region58: #{ner_forward.1} parent=51 // pred_check_branch
              %295 = sbr.rel target = $region60
            $region59: #{ner_forward.1} parent=51 // pred_region
              loop: start=0, step=1, limit=1
              $region61: #{ner_forward.1} parent=59 // loop_pre_header
                _
              $region62: #{ner_forward.1} parent=59 // loop_header
                %s298 = sphi 0, %s302
                %p299 = scmp.ge.s32.totalorder %s298, 1
                %s303 = sphi %s289, %s289
                %s304 = sphi %s286, %s286
              $region63: #{ner_forward.1} parent=59 // loop_header_branch
                %301 = sbr.rel (%p299) target = $region67
              $region64: #{ner_forward.1} parent=59 // loop_body
                %v305 = vld [vmem:[%s303] sm:$0xff]
                %306 = vst [vmem:[%s304] sm:$0xff] %v305
                %v307 = vld [vmem:[%s303 + $0x8] sm:$0xff]
                %308 = vst [vmem:[%s304 + $0x8] sm:$0xff] %v307
                %v309 = vld [vmem:[%s303 + $0x10] sm:$0xff]
                %310 = vst [vmem:[%s304 + $0x10] sm:$0xff] %v309
                %v311 = vld [vmem:[%s303 + $0x18] sm:$0xff]
                %312 = vst [vmem:[%s304 + $0x18] sm:$0xff] %v311
                %v313 = vld [vmem:[%s303 + $0x20] sm:$0xff]
                %314 = vst [vmem:[%s304 + $0x20] sm:$0xff] %v313
                %v315 = vld [vmem:[%s303 + $0x28] sm:$0xff]
                %316 = vst [vmem:[%s304 + $0x28] sm:$0xff] %v315
                %v317 = vld [vmem:[%s303 + $0x30] sm:$0xff]
                %318 = vst [vmem:[%s304 + $0x30] sm:$0xff] %v317
                %v319 = vld [vmem:[%s303 + $0x38] sm:$0xff]
                %320 = vst [vmem:[%s304 + $0x38] sm:$0xff] %v319
                %v321 = vld [vmem:[%s303 + $0x40] sm:$0xff]
                %322 = vst [vmem:[%s304 + $0x40] sm:$0xff] %v321
                %v323 = vld [vmem:[%s303 + $0x48] sm:$0xff]
                %324 = vst [vmem:[%s304 + $0x48] sm:$0xff] %v323
                %v325 = vld [vmem:[%s303 + $0x50] sm:$0xff]
                %326 = vst [vmem:[%s304 + $0x50] sm:$0xff] %v325
                %v327 = vld [vmem:[%s303 + $0x58] sm:$0xff]
                %328 = vst [vmem:[%s304 + $0x58] sm:$0xff] %v327
                %v329 = vld [vmem:[%s303 + $0x60] sm:$0xff]
                %330 = vst [vmem:[%s304 + $0x60] sm:$0xff] %v329
                %v331 = vld [vmem:[%s303 + $0x68] sm:$0xff]
                %332 = vst [vmem:[%s304 + $0x68] sm:$0xff] %v331
                %v333 = vld [vmem:[%s303 + $0x70] sm:$0xff]
                %334 = vst [vmem:[%s304 + $0x70] sm:$0xff] %v333
                %v335 = vld [vmem:[%s303 + $0x78] sm:$0xff]
                %336 = vst [vmem:[%s304 + $0x78] sm:$0xff] %v335
                %v337 = vld [vmem:[%s303 + $0x100] sm:$0xff]
                %338 = vst [vmem:[%s304 + $0x80] sm:$0xff] %v337
                %v339 = vld [vmem:[%s303 + $0x108] sm:$0xff]
                %340 = vst [vmem:[%s304 + $0x88] sm:$0xff] %v339
                %v341 = vld [vmem:[%s303 + $0x110] sm:$0xff]
                %342 = vst [vmem:[%s304 + $0x90] sm:$0xff] %v341
                %v343 = vld [vmem:[%s303 + $0x118] sm:$0xff]
                %344 = vst [vmem:[%s304 + $0x98] sm:$0xff] %v343
                %v345 = vld [vmem:[%s303 + $0x120] sm:$0xff]
                %346 = vst [vmem:[%s304 + $0xa0] sm:$0xff] %v345
                %v347 = vld [vmem:[%s303 + $0x128] sm:$0xff]
                %348 = vst [vmem:[%s304 + $0xa8] sm:$0xff] %v347
                %v349 = vld [vmem:[%s303 + $0x130] sm:$0xff]
                %350 = vst [vmem:[%s304 + $0xb0] sm:$0xff] %v349
                %v351 = vld [vmem:[%s303 + $0x138] sm:$0xff]
                %352 = vst [vmem:[%s304 + $0xb8] sm:$0xff] %v351
                %v353 = vld [vmem:[%s303 + $0x140] sm:$0xff]
                %354 = vst [vmem:[%s304 + $0xc0] sm:$0xff] %v353
                %v355 = vld [vmem:[%s303 + $0x148] sm:$0xff]
                %356 = vst [vmem:[%s304 + $0xc8] sm:$0xff] %v355
                %v357 = vld [vmem:[%s303 + $0x150] sm:$0xff]
                %358 = vst [vmem:[%s304 + $0xd0] sm:$0xff] %v357
                %v359 = vld [vmem:[%s303 + $0x158] sm:$0xff]
                %360 = vst [vmem:[%s304 + $0xd8] sm:$0xff] %v359
                %v361 = vld [vmem:[%s303 + $0x160] sm:$0xff]
                %362 = vst [vmem:[%s304 + $0xe0] sm:$0xff] %v361
                %v363 = vld [vmem:[%s303 + $0x168] sm:$0xff]
                %364 = vst [vmem:[%s304 + $0xe8] sm:$0xff] %v363
                %v365 = vld [vmem:[%s303 + $0x170] sm:$0xff]
                %366 = vst [vmem:[%s304 + $0xf0] sm:$0xff] %v365
                %v367 = vld [vmem:[%s303 + $0x178] sm:$0xff]
                %368 = vst [vmem:[%s304 + $0xf8] sm:$0xff] %v367
                %v369 = vld [vmem:[%s303 + $0x200] sm:$0xff]
                %370 = vst [vmem:[%s304 + $0x100] sm:$0xff] %v369
                %v371 = vld [vmem:[%s303 + $0x208] sm:$0xff]
                %372 = vst [vmem:[%s304 + $0x108] sm:$0xff] %v371
                %v373 = vld [vmem:[%s303 + $0x210] sm:$0xff]
                %374 = vst [vmem:[%s304 + $0x110] sm:$0xff] %v373
                %v375 = vld [vmem:[%s303 + $0x218] sm:$0xff]
                %376 = vst [vmem:[%s304 + $0x118] sm:$0xff] %v375
                %v377 = vld [vmem:[%s303 + $0x220] sm:$0xff]
                %378 = vst [vmem:[%s304 + $0x120] sm:$0xff] %v377
                %v379 = vld [vmem:[%s303 + $0x228] sm:$0xff]
                %380 = vst [vmem:[%s304 + $0x128] sm:$0xff] %v379
                %v381 = vld [vmem:[%s303 + $0x230] sm:$0xff]
                %382 = vst [vmem:[%s304 + $0x130] sm:$0xff] %v381
                %v383 = vld [vmem:[%s303 + $0x238] sm:$0xff]
                %384 = vst [vmem:[%s304 + $0x138] sm:$0xff] %v383
                %v385 = vld [vmem:[%s303 + $0x240] sm:$0xff]
                %386 = vst [vmem:[%s304 + $0x140] sm:$0xff] %v385
                %v387 = vld [vmem:[%s303 + $0x248] sm:$0xff]
                %388 = vst [vmem:[%s304 + $0x148] sm:$0xff] %v387
                %v389 = vld [vmem:[%s303 + $0x250] sm:$0xff]
                %390 = vst [vmem:[%s304 + $0x150] sm:$0xff] %v389
                %v391 = vld [vmem:[%s303 + $0x258] sm:$0xff]
                %392 = vst [vmem:[%s304 + $0x158] sm:$0xff] %v391
                %v393 = vld [vmem:[%s303 + $0x260] sm:$0xff]
                %394 = vst [vmem:[%s304 + $0x160] sm:$0xff] %v393
                %v395 = vld [vmem:[%s303 + $0x268] sm:$0xff]
                %396 = vst [vmem:[%s304 + $0x168] sm:$0xff] %v395
                %v397 = vld [vmem:[%s303 + $0x270] sm:$0xff]
                %398 = vst [vmem:[%s304 + $0x170] sm:$0xff] %v397
                %v399 = vld [vmem:[%s303 + $0x278] sm:$0xff]
                %400 = vst [vmem:[%s304 + $0x178] sm:$0xff] %v399
              $region65: #{ner_forward.1} parent=59 // loop_footer
                %s302 = sadd.s32 1, %s298
              $region66: #{ner_forward.1} parent=59 // loop_footer_branch
                %297 = sbr.rel target = $region62
              $region67: #{ner_forward.1} parent=59 // loop_exit
                _
            $region60: #{ner_forward.1} parent=51 // pred_fallthru
              _
          $region52: #{ner_forward.1} parent=47 // pred_fallthru
            _
          %509 = vnop
        $region48: #{ner_forward.1} parent=43 // pred_fallthru
          _
        // Predicated region
        $region83: #{ner_forward.1} parent=43 // pred_check
          %p510 = pneg %p61
        $region84: #{ner_forward.1} parent=43 // pred_check_branch
          %512 = sbr.rel (%p510) target = $region86
        $region85: #{ner_forward.1} parent=43 // pred_region
          %p513 = scmp.lt.s32.totalorder %s15, 1
          %s514 = scalar_select %p513, %s15, 1
          %s515 = smul.addr %s514, 8
          %s516 = scalar_lea.vmem %s1, %s515
        $region86: #{ner_forward.1} parent=43 // pred_fallthru
          _
      $region44: #{ner_forward.1} parent=5 // pred_fallthru
        _
      %p517 = scmp.le.s32.totalorder 1, %s15
      %p518 = scmp.lt.s32.totalorder %s15, 3
      %p519 = pnand %p517, %p518
      %p520 = pneg %p519
      // Predicated region
      $region87: #{ner_forward.1} parent=5 // pred_check
        _
      $region88: #{ner_forward.1} parent=5 // pred_check_branch
        %522 = sbr.rel (%p519) target = $region90
      $region89: #{ner_forward.1} parent=5 // pred_region
        %s523 = ssub.s32 %s15, 1
        %s524 = sand.u32 %s28, 1
        %s525 = sand.u32 %s28, 1
        %s526 = smul.addr %s525, 384
        %s527 = scalar_lea.vmem [#allocation2], %s526
        // Predicated region
        $region91: #{ner_forward.1} parent=89 // pred_check
          %p528 = pneg %p41
        $region92: #{ner_forward.1} parent=89 // pred_check_branch
          %530 = sbr.rel (%p528) target = $region94
        $region93: #{ner_forward.1} parent=89 // pred_region
          _
        $region94: #{ner_forward.1} parent=89 // pred_fallthru
          _
        %s531 = sand.u32 %s28, 1
        %s532 = sand.u32 %s28, 1
        %s533 = smul.addr %s532, 384
        %s534 = scalar_lea.vmem [#allocation2], %s533
        %p535 = pneg %p41
        %p536 = pneg %p38
        %p537 = scmp.lt.s32.totalorder %s20, 1
        %s538 = scalar_select %p537, %s20, 1
        %s539 = smul.addr %s538, 8
        %s540 = scalar_lea.vmem %s1, %s539
        %p541 = pneg %p67
        %p542 = pneg %p64
        %p543 = pneg %p88
        %p544 = pneg %p85
        %p545 = pneg %p109
        %p546 = pneg %p106
        %p547 = pneg %p130
        %p548 = pneg %p127
        %p549 = pneg %p151
        %p550 = pneg %p148
        %p551 = pneg %p172
        %p552 = pneg %p169
        %p553 = pneg %p193
        %p554 = pneg %p190
        %p555 = pneg %p214
        %p556 = pneg %p211
        %p557 = pneg %p240
        %p558 = pneg %p237
        %p559 = scmp.lt.s32.totalorder %s20, 1
        %s560 = scalar_select %p559, %s20, 1
        %s561 = smul.addr %s560, 8
        %s562 = scalar_lea.vmem %s9, %s561
        %s563 = smul.u32 16, %s20
        %p564 = scmp.lt.s32.totalorder %s20, 1
        %s565 = scalar_select %p564, %s20, 1
        %s566 = smul.addr %s565, 8
        %s567 = scalar_lea.vmem %s1, %s566
        %p568 = scmp.lt.s32.totalorder %s20, 1
        %s569 = scalar_select %p568, %s20, 1
        %s570 = smul.addr %s569, 8
        %s571 = scalar_lea.vmem %s9, %s570
        %v572 = vlaneseq
        %v573 = vand.u32 %v572, 127
        %v574 = vld [vmem:[%s527] sm:$0xff]
        %v575 = vld [vmem:[%s527 + $0x8] sm:$0xff]
        %v576 = vld [vmem:[%s527 + $0x10] sm:$0xff]
        %v577 = vld [vmem:[%s527 + $0x18] sm:$0xff]
        %v578 = vld [vmem:[%s527 + $0x20] sm:$0xff]
        %v579 = vld [vmem:[%s527 + $0x28] sm:$0xff]
        %v580 = vld [vmem:[%s527 + $0x30] sm:$0xff]
        %v581 = vld [vmem:[%s527 + $0x38] sm:$0xff]
        %v582 = vld [vmem:[%s527 + $0x40] sm:$0xff]
        %v583 = vld [vmem:[%s527 + $0x48] sm:$0xff]
        %v584 = vld [vmem:[%s527 + $0x50] sm:$0xff]
        %v585 = vld [vmem:[%s527 + $0x58] sm:$0xff]
        %v586 = vld [vmem:[%s527 + $0x60] sm:$0xff]
        %v587 = vld [vmem:[%s527 + $0x68] sm:$0xff]
        %v588 = vld [vmem:[%s527 + $0x70] sm:$0xff]
        %v589 = vld [vmem:[%s527 + $0x78] sm:$0xff]
        %590 = vset.pattern.permute.xlu0 0
        %591 = vperm.xlu0 %590, %v574
        %v592 = vpop.permute.xlu0 %591
        %593 = vset.pattern.permute.xlu0 0
        %594 = vperm.xlu0 %593, %v575
        %v595 = vpop.permute.xlu0 %594
        %596 = vset.pattern.permute.xlu0 0
        %597 = vperm.xlu0 %596, %v576
        %v598 = vpop.permute.xlu0 %597
        %599 = vset.pattern.permute.xlu0 0
        %600 = vperm.xlu0 %599, %v577
        %v601 = vpop.permute.xlu0 %600
        %602 = vset.pattern.permute.xlu0 0
        %603 = vperm.xlu0 %602, %v578
        %v604 = vpop.permute.xlu0 %603
        %605 = vset.pattern.permute.xlu0 0
        %606 = vperm.xlu0 %605, %v579
        %v607 = vpop.permute.xlu0 %606
        %608 = vset.pattern.permute.xlu0 0
        %609 = vperm.xlu0 %608, %v580
        %v610 = vpop.permute.xlu0 %609
        %611 = vset.pattern.permute.xlu0 0
        %612 = vperm.xlu0 %611, %v581
        %v613 = vpop.permute.xlu0 %612
        %614 = vset.pattern.permute.xlu0 0
        %615 = vperm.xlu0 %614, %v582
        %v616 = vpop.permute.xlu0 %615
        %617 = vset.pattern.permute.xlu0 0
        %618 = vperm.xlu0 %617, %v583
        %v619 = vpop.permute.xlu0 %618
        %620 = vset.pattern.permute.xlu0 0
        %621 = vperm.xlu0 %620, %v584
        %v622 = vpop.permute.xlu0 %621
        %623 = vset.pattern.permute.xlu0 0
        %624 = vperm.xlu0 %623, %v585
        %v625 = vpop.permute.xlu0 %624
        %626 = vset.pattern.permute.xlu0 0
        %627 = vperm.xlu0 %626, %v586
        %v628 = vpop.permute.xlu0 %627
        %629 = vset.pattern.permute.xlu0 0
        %630 = vperm.xlu0 %629, %v587
        %v631 = vpop.permute.xlu0 %630
        %632 = vset.pattern.permute.xlu0 0
        %633 = vperm.xlu0 %632, %v588
        %v634 = vpop.permute.xlu0 %633
        %635 = vset.pattern.permute.xlu0 0
        %636 = vperm.xlu0 %635, %v589
        %v637 = vpop.permute.xlu0 %636
        %vm638 = vcmp.eq.s32.totalorder %v573, %v592
        %vm639 = vcmp.eq.s32.totalorder %v573, %v595
        %vm640 = vcmp.eq.s32.totalorder %v573, %v598
        %vm641 = vcmp.eq.s32.totalorder %v573, %v601
        %vm642 = vcmp.eq.s32.totalorder %v573, %v604
        %vm643 = vcmp.eq.s32.totalorder %v573, %v607
        %vm644 = vcmp.eq.s32.totalorder %v573, %v610
        %vm645 = vcmp.eq.s32.totalorder %v573, %v613
        %vm646 = vcmp.eq.s32.totalorder %v573, %v616
        %vm647 = vcmp.eq.s32.totalorder %v573, %v619
        %vm648 = vcmp.eq.s32.totalorder %v573, %v622
        %vm649 = vcmp.eq.s32.totalorder %v573, %v625
        %vm650 = vcmp.eq.s32.totalorder %v573, %v628
        %vm651 = vcmp.eq.s32.totalorder %v573, %v631
        %vm652 = vcmp.eq.s32.totalorder %v573, %v634
        %vm653 = vcmp.eq.s32.totalorder %v573, %v637
        %v654 = vsel %vm638, 1, 0
        %v655 = vsel %vm639, 1, 0
        %v656 = vsel %vm640, 1, 0
        %v657 = vsel %vm641, 1, 0
        %v658 = vsel %vm642, 1, 0
        %v659 = vsel %vm643, 1, 0
        %v660 = vsel %vm644, 1, 0
        %v661 = vsel %vm645, 1, 0
        %v662 = vsel %vm646, 1, 0
        %v663 = vsel %vm647, 1, 0
        %v664 = vsel %vm648, 1, 0
        %v665 = vsel %vm649, 1, 0
        %v666 = vsel %vm650, 1, 0
        %v667 = vsel %vm651, 1, 0
        %v668 = vsel %vm652, 1, 0
        %v669 = vsel %vm653, 1, 0
        %v670 = vcvt.s32.f32 %v654
        %v671 = vcvt.s32.f32 %v655
        %v672 = vcvt.s32.f32 %v656
        %v673 = vcvt.s32.f32 %v657
        %v674 = vcvt.s32.f32 %v658
        %v675 = vcvt.s32.f32 %v659
        %v676 = vcvt.s32.f32 %v660
        %v677 = vcvt.s32.f32 %v661
        %v678 = vcvt.s32.f32 %v662
        %v679 = vcvt.s32.f32 %v663
        %v680 = vcvt.s32.f32 %v664
        %v681 = vcvt.s32.f32 %v665
        %v682 = vcvt.s32.f32 %v666
        %v683 = vcvt.s32.f32 %v667
        %v684 = vcvt.s32.f32 %v668
        %v685 = vcvt.s32.f32 %v669
        %v686 = vld [vmem:[%s2] sm:$0xff]
        %v687 = vld [vmem:[%s2 + $0x8] sm:$0xff]
        %v688 = vld [vmem:[%s2 + $0x10] sm:$0xff]
        %v689 = vld [vmem:[%s2 + $0x18] sm:$0xff]
        %v690 = vld [vmem:[%s2 + $0x20] sm:$0xff]
        %v691 = vld [vmem:[%s2 + $0x28] sm:$0xff]
        %v692 = vld [vmem:[%s2 + $0x30] sm:$0xff]
        %v693 = vld [vmem:[%s2 + $0x38] sm:$0xff]
        %v694 = vld [vmem:[%s2 + $0x40] sm:$0xff]
        %v695 = vld [vmem:[%s2 + $0x48] sm:$0xff]
        %v696 = vld [vmem:[%s2 + $0x50] sm:$0xff]
        %v697 = vld [vmem:[%s2 + $0x58] sm:$0xff]
        %v698 = vld [vmem:[%s2 + $0x60] sm:$0xff]
        %v699 = vld [vmem:[%s2 + $0x68] sm:$0xff]
        %v700 = vld [vmem:[%s2 + $0x70] sm:$0xff]
        %v701 = vld [vmem:[%s2 + $0x78] sm:$0xff]
        %s702 = scalar_lea.vmem %s527, 128 [#allocation2]
        %v703 = vld [vmem:[%s702] sm:$0xff]
        %v704 = vld [vmem:[%s702 + $0x8] sm:$0xff]
        %v705 = vld [vmem:[%s702 + $0x10] sm:$0xff]
        %v706 = vld [vmem:[%s702 + $0x18] sm:$0xff]
        %v707 = vld [vmem:[%s702 + $0x20] sm:$0xff]
        %v708 = vld [vmem:[%s702 + $0x28] sm:$0xff]
        %v709 = vld [vmem:[%s702 + $0x30] sm:$0xff]
        %v710 = vld [vmem:[%s702 + $0x38] sm:$0xff]
        %v711 = vld [vmem:[%s702 + $0x40] sm:$0xff]
        %v712 = vld [vmem:[%s702 + $0x48] sm:$0xff]
        %v713 = vld [vmem:[%s702 + $0x50] sm:$0xff]
        %v714 = vld [vmem:[%s702 + $0x58] sm:$0xff]
        %v715 = vld [vmem:[%s702 + $0x60] sm:$0xff]
        %v716 = vld [vmem:[%s702 + $0x68] sm:$0xff]
        %v717 = vld [vmem:[%s702 + $0x70] sm:$0xff]
        %v718 = vld [vmem:[%s702 + $0x78] sm:$0xff]
        %719 = vset.pattern.permute.xlu0 0
        %720 = vperm.xlu0 %719, %v703
        %v721 = vpop.permute.xlu0 %720
        %722 = vset.pattern.permute.xlu0 0
        %723 = vperm.xlu0 %722, %v704
        %v724 = vpop.permute.xlu0 %723
        %725 = vset.pattern.permute.xlu0 0
        %726 = vperm.xlu0 %725, %v705
        %v727 = vpop.permute.xlu0 %726
        %728 = vset.pattern.permute.xlu0 0
        %729 = vperm.xlu0 %728, %v706
        %v730 = vpop.permute.xlu0 %729
        %731 = vset.pattern.permute.xlu0 0
        %732 = vperm.xlu0 %731, %v707
        %v733 = vpop.permute.xlu0 %732
        %734 = vset.pattern.permute.xlu0 0
        %735 = vperm.xlu0 %734, %v708
        %v736 = vpop.permute.xlu0 %735
        %737 = vset.pattern.permute.xlu0 0
        %738 = vperm.xlu0 %737, %v709
        %v739 = vpop.permute.xlu0 %738
        %740 = vset.pattern.permute.xlu0 0
        %741 = vperm.xlu0 %740, %v710
        %v742 = vpop.permute.xlu0 %741
        %743 = vset.pattern.permute.xlu0 0
        %744 = vperm.xlu0 %743, %v711
        %v745 = vpop.permute.xlu0 %744
        %746 = vset.pattern.permute.xlu0 0
        %747 = vperm.xlu0 %746, %v712
        %v748 = vpop.permute.xlu0 %747
        %749 = vset.pattern.permute.xlu0 0
        %750 = vperm.xlu0 %749, %v713
        %v751 = vpop.permute.xlu0 %750
        %752 = vset.pattern.permute.xlu0 0
        %753 = vperm.xlu0 %752, %v714
        %v754 = vpop.permute.xlu0 %753
        %755 = vset.pattern.permute.xlu0 0
        %756 = vperm.xlu0 %755, %v715
        %v757 = vpop.permute.xlu0 %756
        %758 = vset.pattern.permute.xlu0 0
        %759 = vperm.xlu0 %758, %v716
        %v760 = vpop.permute.xlu0 %759
        %761 = vset.pattern.permute.xlu0 0
        %762 = vperm.xlu0 %761, %v717
        %v763 = vpop.permute.xlu0 %762
        %764 = vset.pattern.permute.xlu0 0
        %765 = vperm.xlu0 %764, %v718
        %v766 = vpop.permute.xlu0 %765
        %vm767 = vcmp.eq.s32.totalorder %v573, %v721
        %vm768 = vcmp.eq.s32.totalorder %v573, %v724
        %vm769 = vcmp.eq.s32.totalorder %v573, %v727
        %vm770 = vcmp.eq.s32.totalorder %v573, %v730
        %vm771 = vcmp.eq.s32.totalorder %v573, %v733
        %vm772 = vcmp.eq.s32.totalorder %v573, %v736
        %vm773 = vcmp.eq.s32.totalorder %v573, %v739
        %vm774 = vcmp.eq.s32.totalorder %v573, %v742
        %vm775 = vcmp.eq.s32.totalorder %v573, %v745
        %vm776 = vcmp.eq.s32.totalorder %v573, %v748
        %vm777 = vcmp.eq.s32.totalorder %v573, %v751
        %vm778 = vcmp.eq.s32.totalorder %v573, %v754
        %vm779 = vcmp.eq.s32.totalorder %v573, %v757
        %vm780 = vcmp.eq.s32.totalorder %v573, %v760
        %vm781 = vcmp.eq.s32.totalorder %v573, %v763
        %vm782 = vcmp.eq.s32.totalorder %v573, %v766
        %v783 = vsel %vm767, 1, 0
        %v784 = vsel %vm768, 1, 0
        %v785 = vsel %vm769, 1, 0
        %v786 = vsel %vm770, 1, 0
        %v787 = vsel %vm771, 1, 0
        %v788 = vsel %vm772, 1, 0
        %v789 = vsel %vm773, 1, 0
        %v790 = vsel %vm774, 1, 0
        %v791 = vsel %vm775, 1, 0
        %v792 = vsel %vm776, 1, 0
        %v793 = vsel %vm777, 1, 0
        %v794 = vsel %vm778, 1, 0
        %v795 = vsel %vm779, 1, 0
        %v796 = vsel %vm780, 1, 0
        %v797 = vsel %vm781, 1, 0
        %v798 = vsel %vm782, 1, 0
        %v799 = vcvt.s32.f32 %v783
        %v800 = vcvt.s32.f32 %v784
        %v801 = vcvt.s32.f32 %v785
        %v802 = vcvt.s32.f32 %v786
        %v803 = vcvt.s32.f32 %v787
        %v804 = vcvt.s32.f32 %v788
        %v805 = vcvt.s32.f32 %v789
        %v806 = vcvt.s32.f32 %v790
        %v807 = vcvt.s32.f32 %v791
        %v808 = vcvt.s32.f32 %v792
        %v809 = vcvt.s32.f32 %v793
        %v810 = vcvt.s32.f32 %v794
        %v811 = vcvt.s32.f32 %v795
        %v812 = vcvt.s32.f32 %v796
        %v813 = vcvt.s32.f32 %v797
        %v814 = vcvt.s32.f32 %v798
        %s815 = scalar_lea.vmem %s2, 128
        %v816 = vld [vmem:[%s815] sm:$0xff]
        %v817 = vld [vmem:[%s815 + $0x8] sm:$0xff]
        %v818 = vld [vmem:[%s815 + $0x10] sm:$0xff]
        %v819 = vld [vmem:[%s815 + $0x18] sm:$0xff]
        %v820 = vld [vmem:[%s815 + $0x20] sm:$0xff]
        %v821 = vld [vmem:[%s815 + $0x28] sm:$0xff]
        %v822 = vld [vmem:[%s815 + $0x30] sm:$0xff]
        %v823 = vld [vmem:[%s815 + $0x38] sm:$0xff]
        %v824 = vld [vmem:[%s815 + $0x40] sm:$0xff]
        %v825 = vld [vmem:[%s815 + $0x48] sm:$0xff]
        %v826 = vld [vmem:[%s815 + $0x50] sm:$0xff]
        %v827 = vld [vmem:[%s815 + $0x58] sm:$0xff]
        %v828 = vld [vmem:[%s815 + $0x60] sm:$0xff]
        %v829 = vld [vmem:[%s815 + $0x68] sm:$0xff]
        %v830 = vld [vmem:[%s815 + $0x70] sm:$0xff]
        %v831 = vld [vmem:[%s815 + $0x78] sm:$0xff]
        %832 = vmatprep.subr.mxu0 0.0
        %833 = vmatpush1.msra.mxu0 %v816
        %834 = vmatprep.subr.mxu0 0.0
        %835 = vmatpush1.msra.mxu0 %v817
        %836 = vmatprep.subr.mxu0 0.0
        %837 = vmatpush1.msra.mxu0 %v818
        %838 = vmatprep.subr.mxu0 0.0
        %839 = vmatpush1.msra.mxu0 %v819
        %840 = vmatprep.subr.mxu0 0.0
        %841 = vmatpush1.msra.mxu0 %v820
        %842 = vmatprep.subr.mxu0 0.0
        %843 = vmatpush1.msra.mxu0 %v821
        %844 = vmatprep.subr.mxu0 0.0
        %845 = vmatpush1.msra.mxu0 %v822
        %846 = vmatprep.subr.mxu0 0.0
        %847 = vmatpush1.msra.mxu0 %v823
        %848 = vmatprep.subr.mxu0 0.0
        %849 = vmatpush1.msra.mxu0 %v824
        %850 = vmatprep.subr.mxu0 0.0
        %851 = vmatpush1.msra.mxu0 %v825
        %852 = vmatprep.subr.mxu0 0.0
        %853 = vmatpush1.msra.mxu0 %v826
        %854 = vmatprep.subr.mxu0 0.0
        %855 = vmatpush1.msra.mxu0 %v827
        %856 = vmatprep.subr.mxu0 0.0
        %857 = vmatpush1.msra.mxu0 %v828
        %858 = vmatprep.subr.mxu0 0.0
        %859 = vmatpush1.msra.mxu0 %v829
        %860 = vmatprep.subr.mxu0 0.0
        %861 = vmatpush1.msra.mxu0 %v830
        %862 = vmatprep.subr.mxu0 0.0
        %863 = vmatpush1.msra.mxu0 %v831
        %864 = vmatprep.subr.mxu0 0.0
        %865 = vmatpush1.msra.mxu0 0.0
        %866 = vmatprep.subr.mxu0 0.0
        %867 = vmatpush1.msra.mxu0 0.0
        %868 = vmatprep.subr.mxu0 0.0
        %869 = vmatpush1.msra.mxu0 0.0
        %870 = vmatprep.subr.mxu0 0.0
        %871 = vmatpush1.msra.mxu0 0.0
        %872 = vmatprep.subr.mxu0 0.0
        %873 = vmatpush1.msra.mxu0 0.0
        %874 = vmatprep.subr.mxu0 0.0
        %875 = vmatpush1.msra.mxu0 0.0
        %876 = vmatprep.subr.mxu0 0.0
        %877 = vmatpush1.msra.mxu0 0.0
        %878 = vmatprep.subr.mxu0 0.0
        %879 = vmatpush1.msra.mxu0 0.0
        %880 = vmatprep.subr.mxu0 0.0
        %881 = vmatpush1.msra.mxu0 0.0
        %882 = vmatprep.subr.mxu0 0.0
        %883 = vmatpush1.msra.mxu0 0.0
        %884 = vmatprep.subr.mxu0 0.0
        %885 = vmatpush1.msra.mxu0 0.0
        %886 = vmatprep.subr.mxu0 0.0
        %887 = vmatpush1.msra.mxu0 0.0
        %888 = vmatprep.subr.mxu0 0.0
        %889 = vmatpush1.msra.mxu0 0.0
        %890 = vmatprep.subr.mxu0 0.0
        %891 = vmatpush1.msra.mxu0 0.0
        %892 = vmatprep.subr.mxu0 0.0
        %893 = vmatpush1.msra.mxu0 0.0
        %894 = vmatprep.subr.mxu0 0.0
        %895 = vmatpush1.msra.mxu0 0.0
        %896 = vmatprep.mubr.f32.mxu0 0.0
        %897 = vmatmul.mubr.f32.gmra.mrb[0].mxu0 %v799
        %v898 = vpop.f32.mrb[0].mxu0
        %v899 = vadd.f32 0.0, %v898
        %v900 = vpop.f32.mrb[0].mxu0
        %901 = vmatprep.mubr.f32.mxu0 0.0
        %902 = vmatmul.mubr.f32.gmra.mrb[0].mxu0 %v800
        %v903 = vpop.f32.mrb[0].mxu0
        %v904 = vadd.f32 0.0, %v903
        %v905 = vpop.f32.mrb[0].mxu0
        %906 = vmatprep.mubr.f32.mxu0 0.0
        %907 = vmatmul.mubr.f32.gmra.mrb[0].mxu0 %v801
        %v908 = vpop.f32.mrb[0].mxu0
        %v909 = vadd.f32 0.0, %v908
        %v910 = vpop.f32.mrb[0].mxu0
        %911 = vmatprep.mubr.f32.mxu0 0.0
        %912 = vmatmul.mubr.f32.gmra.mrb[0].mxu0 %v802
        %v913 = vpop.f32.mrb[0].mxu0
        %v914 = vadd.f32 0.0, %v913
        %v915 = vpop.f32.mrb[0].mxu0
        %916 = vmatprep.mubr.f32.mxu0 0.0
        %917 = vmatmul.mubr.f32.gmra.mrb[0].mxu0 %v803
        %v918 = vpop.f32.mrb[0].mxu0
        %v919 = vadd.f32 0.0, %v918
        %v920 = vpop.f32.mrb[0].mxu0
        %921 = vmatprep.mubr.f32.mxu0 0.0
        %922 = vmatmul.mubr.f32.gmra.mrb[0].mxu0 %v804
        %v923 = vpop.f32.mrb[0].mxu0
        %v924 = vadd.f32 0.0, %v923
        %v925 = vpop.f32.mrb[0].mxu0
        %926 = vmatprep.mubr.f32.mxu0 0.0
        %927 = vmatmul.mubr.f32.gmra.mrb[0].mxu0 %v805
        %v928 = vpop.f32.mrb[0].mxu0
        %v929 = vadd.f32 0.0, %v928
        %v930 = vpop.f32.mrb[0].mxu0
        %931 = vmatprep.mubr.f32.mxu0 0.0
        %932 = vmatmul.mubr.f32.gmra.mrb[0].mxu0 %v806
        %v933 = vpop.f32.mrb[0].mxu0
        %v934 = vadd.f32 0.0, %v933
        %v935 = vpop.f32.mrb[0].mxu0
        %936 = vmatprep.mubr.f32.mxu0 0.0
        %937 = vmatmul.mubr.f32.gmra.mrb[0].mxu0 %v807
        %v938 = vpop.f32.mrb[0].mxu0
        %v939 = vadd.f32 0.0, %v938
        %v940 = vpop.f32.mrb[0].mxu0
        %941 = vmatprep.mubr.f32.mxu0 0.0
        %942 = vmatmul.mubr.f32.gmra.mrb[0].mxu0 %v808
        %v943 = vpop.f32.mrb[0].mxu0
        %v944 = vadd.f32 0.0, %v943
        %v945 = vpop.f32.mrb[0].mxu0
        %946 = vmatprep.mubr.f32.mxu0 0.0
        %947 = vmatmul.mubr.f32.gmra.mrb[0].mxu0 %v809
        %v948 = vpop.f32.mrb[0].mxu0
        %v949 = vadd.f32 0.0, %v948
        %v950 = vpop.f32.mrb[0].mxu0
        %951 = vmatprep.mubr.f32.mxu0 0.0
        %952 = vmatmul.mubr.f32.gmra.mrb[0].mxu0 %v810
        %v953 = vpop.f32.mrb[0].mxu0
        %v954 = vadd.f32 0.0, %v953
        %v955 = vpop.f32.mrb[0].mxu0
        %956 = vmatprep.mubr.f32.mxu0 0.0
        %957 = vmatmul.mubr.f32.gmra.mrb[0].mxu0 %v811
        %v958 = vpop.f32.mrb[0].mxu0
        %v959 = vadd.f32 0.0, %v958
        %v960 = vpop.f32.mrb[0].mxu0
        %961 = vmatprep.mubr.f32.mxu0 0.0
        %962 = vmatmul.mubr.f32.gmra.mrb[0].mxu0 %v812
        %v963 = vpop.f32.mrb[0].mxu0
        %v964 = vadd.f32 0.0, %v963
        %v965 = vpop.f32.mrb[0].mxu0
        %966 = vmatprep.mubr.f32.mxu0 0.0
        %967 = vmatmul.mubr.f32.gmra.mrb[0].mxu0 %v813
        %v968 = vpop.f32.mrb[0].mxu0
        %v969 = vadd.f32 0.0, %v968
        %v970 = vpop.f32.mrb[0].mxu0
        %971 = vmatprep.mubr.f32.mxu0 0.0
        %972 = vmatmul.mubr.f32.gmra.mrb[0].mxu0 %v814
        %v973 = vpop.f32.mrb[0].mxu0
        %v974 = vadd.f32 0.0, %v973
        %v975 = vpop.f32.mrb[0].mxu0
        %976 = vdwg.mxu0
        %977 = vmatprep.subr.mxu0 0.0
        %978 = vmatpush1.msra.mxu0 %v686
        %979 = vmatprep.subr.mxu0 0.0
        %980 = vmatpush1.msra.mxu0 %v687
        %981 = vmatprep.subr.mxu0 0.0
        %982 = vmatpush1.msra.mxu0 %v688
        %983 = vmatprep.subr.mxu0 0.0
        %984 = vmatpush1.msra.mxu0 %v689
        %985 = vmatprep.subr.mxu0 0.0
        %986 = vmatpush1.msra.mxu0 %v690
        %987 = vmatprep.subr.mxu0 0.0
        %988 = vmatpush1.msra.mxu0 %v691
        %989 = vmatprep.subr.mxu0 0.0
        %990 = vmatpush1.msra.mxu0 %v692
        %991 = vmatprep.subr.mxu0 0.0
        %992 = vmatpush1.msra.mxu0 %v693
        %993 = vmatprep.subr.mxu0 0.0
        %994 = vmatpush1.msra.mxu0 %v694
        %995 = vmatprep.subr.mxu0 0.0
        %996 = vmatpush1.msra.mxu0 %v695
        %997 = vmatprep.subr.mxu0 0.0
        %998 = vmatpush1.msra.mxu0 %v696
        %999 = vmatprep.subr.mxu0 0.0
        %1000 = vmatpush1.msra.mxu0 %v697
        %1001 = vmatprep.subr.mxu0 0.0
        %1002 = vmatpush1.msra.mxu0 %v698
        %1003 = vmatprep.subr.mxu0 0.0
        %1004 = vmatpush1.msra.mxu0 %v699
        %1005 = vmatprep.subr.mxu0 0.0
        %1006 = vmatpush1.msra.mxu0 %v700
        %1007 = vmatprep.subr.mxu0 0.0
        %1008 = vmatpush1.msra.mxu0 %v701
        %1009 = vmatprep.subr.mxu0 0.0
        %1010 = vmatpush1.msra.mxu0 0.0
        %1011 = vmatprep.subr.mxu0 0.0
        %1012 = vmatpush1.msra.mxu0 0.0
        %1013 = vmatprep.subr.mxu0 0.0
        %1014 = vmatpush1.msra.mxu0 0.0
        %1015 = vmatprep.subr.mxu0 0.0
        %1016 = vmatpush1.msra.mxu0 0.0
        %1017 = vmatprep.subr.mxu0 0.0
        %1018 = vmatpush1.msra.mxu0 0.0
        %1019 = vmatprep.subr.mxu0 0.0
        %1020 = vmatpush1.msra.mxu0 0.0
        %1021 = vmatprep.subr.mxu0 0.0
        %1022 = vmatpush1.msra.mxu0 0.0
        %1023 = vmatprep.subr.mxu0 0.0
        %1024 = vmatpush1.msra.mxu0 0.0
        %1025 = vmatprep.subr.mxu0 0.0
        %1026 = vmatpush1.msra.mxu0 0.0
        %1027 = vmatprep.subr.mxu0 0.0
        %1028 = vmatpush1.msra.mxu0 0.0
        %1029 = vmatprep.subr.mxu0 0.0
        %1030 = vmatpush1.msra.mxu0 0.0
        %1031 = vmatprep.subr.mxu0 0.0
        %1032 = vmatpush1.msra.mxu0 0.0
        %1033 = vmatprep.subr.mxu0 0.0
        %1034 = vmatpush1.msra.mxu0 0.0
        %1035 = vmatprep.subr.mxu0 0.0
        %1036 = vmatpush1.msra.mxu0 0.0
        %1037 = vmatprep.subr.mxu0 0.0
        %1038 = vmatpush1.msra.mxu0 0.0
        %1039 = vmatprep.subr.mxu0 0.0
        %1040 = vmatpush1.msra.mxu0 0.0
        %1041 = vmatprep.mubr.f32.mxu0 0.0
        %1042 = vmatmul.mubr.f32.gmra.mrb[0].mxu0 %v670
        %v1043 = vpop.f32.mrb[0].mxu0
        %v1044 = vadd.f32 %v899, %v1043
        %v1045 = vpop.f32.mrb[0].mxu0
        %1046 = vmatprep.mubr.f32.mxu0 0.0
        %1047 = vmatmul.mubr.f32.gmra.mrb[0].mxu0 %v671
        %v1048 = vpop.f32.mrb[0].mxu0
        %v1049 = vadd.f32 %v904, %v1048
        %v1050 = vpop.f32.mrb[0].mxu0
        %1051 = vmatprep.mubr.f32.mxu0 0.0
        %1052 = vmatmul.mubr.f32.gmra.mrb[0].mxu0 %v672
        %v1053 = vpop.f32.mrb[0].mxu0
        %v1054 = vadd.f32 %v909, %v1053
        %v1055 = vpop.f32.mrb[0].mxu0
        %1056 = vmatprep.mubr.f32.mxu0 0.0
        %1057 = vmatmul.mubr.f32.gmra.mrb[0].mxu0 %v673
        %v1058 = vpop.f32.mrb[0].mxu0
        %v1059 = vadd.f32 %v914, %v1058
        %v1060 = vpop.f32.mrb[0].mxu0
        %1061 = vmatprep.mubr.f32.mxu0 0.0
        %1062 = vmatmul.mubr.f32.gmra.mrb[0].mxu0 %v674
        %v1063 = vpop.f32.mrb[0].mxu0
        %v1064 = vadd.f32 %v919, %v1063
        %v1065 = vpop.f32.mrb[0].mxu0
        %1066 = vmatprep.mubr.f32.mxu0 0.0
        %1067 = vmatmul.mubr.f32.gmra.mrb[0].mxu0 %v675
        %v1068 = vpop.f32.mrb[0].mxu0
        %v1069 = vadd.f32 %v924, %v1068
        %v1070 = vpop.f32.mrb[0].mxu0
        %1071 = vmatprep.mubr.f32.mxu0 0.0
        %1072 = vmatmul.mubr.f32.gmra.mrb[0].mxu0 %v676
        %v1073 = vpop.f32.mrb[0].mxu0
        %v1074 = vadd.f32 %v929, %v1073
        %v1075 = vpop.f32.mrb[0].mxu0
        %1076 = vmatprep.mubr.f32.mxu0 0.0
        %1077 = vmatmul.mubr.f32.gmra.mrb[0].mxu0 %v677
        %v1078 = vpop.f32.mrb[0].mxu0
        %v1079 = vadd.f32 %v934, %v1078
        %v1080 = vpop.f32.mrb[0].mxu0
        %1081 = vmatprep.mubr.f32.mxu0 0.0
        %1082 = vmatmul.mubr.f32.gmra.mrb[0].mxu0 %v678
        %v1083 = vpop.f32.mrb[0].mxu0
        %v1084 = vadd.f32 %v939, %v1083
        %v1085 = vpop.f32.mrb[0].mxu0
        %1086 = vmatprep.mubr.f32.mxu0 0.0
        %1087 = vmatmul.mubr.f32.gmra.mrb[0].mxu0 %v679
        %v1088 = vpop.f32.mrb[0].mxu0
        %v1089 = vadd.f32 %v944, %v1088
        %v1090 = vpop.f32.mrb[0].mxu0
        %1091 = vmatprep.mubr.f32.mxu0 0.0
        %1092 = vmatmul.mubr.f32.gmra.mrb[0].mxu0 %v680
        %v1093 = vpop.f32.mrb[0].mxu0
        %v1094 = vadd.f32 %v949, %v1093
        %v1095 = vpop.f32.mrb[0].mxu0
        %1096 = vmatprep.mubr.f32.mxu0 0.0
        %1097 = vmatmul.mubr.f32.gmra.mrb[0].mxu0 %v681
        %v1098 = vpop.f32.mrb[0].mxu0
        %v1099 = vadd.f32 %v954, %v1098
        %v1100 = vpop.f32.mrb[0].mxu0
        %1101 = vmatprep.mubr.f32.mxu0 0.0
        %1102 = vmatmul.mubr.f32.gmra.mrb[0].mxu0 %v682
        %v1103 = vpop.f32.mrb[0].mxu0
        %v1104 = vadd.f32 %v959, %v1103
        %v1105 = vpop.f32.mrb[0].mxu0
        %1106 = vmatprep.mubr.f32.mxu0 0.0
        %1107 = vmatmul.mubr.f32.gmra.mrb[0].mxu0 %v683
        %v1108 = vpop.f32.mrb[0].mxu0
        %v1109 = vadd.f32 %v964, %v1108
        %v1110 = vpop.f32.mrb[0].mxu0
        %1111 = vmatprep.mubr.f32.mxu0 0.0
        %1112 = vmatmul.mubr.f32.gmra.mrb[0].mxu0 %v684
        %v1113 = vpop.f32.mrb[0].mxu0
        %v1114 = vadd.f32 %v969, %v1113
        %v1115 = vpop.f32.mrb[0].mxu0
        %1116 = vmatprep.mubr.f32.mxu0 0.0
        %1117 = vmatmul.mubr.f32.gmra.mrb[0].mxu0 %v685
        %v1118 = vpop.f32.mrb[0].mxu0
        %v1119 = vadd.f32 %v974, %v1118
        %v1120 = vpop.f32.mrb[0].mxu0
        %1121 = vdwg.mxu0
        %s1122 = scalar_lea.vmem %s527, 256 [#allocation2]
        %v1123 = vld [vmem:[%s1122] sm:$0xff]
        %v1124 = vld [vmem:[%s1122 + $0x8] sm:$0xff]
        %v1125 = vld [vmem:[%s1122 + $0x10] sm:$0xff]
        %v1126 = vld [vmem:[%s1122 + $0x18] sm:$0xff]
        %v1127 = vld [vmem:[%s1122 + $0x20] sm:$0xff]
        %v1128 = vld [vmem:[%s1122 + $0x28] sm:$0xff]
        %v1129 = vld [vmem:[%s1122 + $0x30] sm:$0xff]
        %v1130 = vld [vmem:[%s1122 + $0x38] sm:$0xff]
        %v1131 = vld [vmem:[%s1122 + $0x40] sm:$0xff]
        %v1132 = vld [vmem:[%s1122 + $0x48] sm:$0xff]
        %v1133 = vld [vmem:[%s1122 + $0x50] sm:$0xff]
        %v1134 = vld [vmem:[%s1122 + $0x58] sm:$0xff]
        %v1135 = vld [vmem:[%s1122 + $0x60] sm:$0xff]
        %v1136 = vld [vmem:[%s1122 + $0x68] sm:$0xff]
        %v1137 = vld [vmem:[%s1122 + $0x70] sm:$0xff]
        %v1138 = vld [vmem:[%s1122 + $0x78] sm:$0xff]
        %1139 = vset.pattern.permute.xlu0 0
        %1140 = vperm.xlu0 %1139, %v1123
        %v1141 = vpop.permute.xlu0 %1140
        %1142 = vset.pattern.permute.xlu0 0
        %1143 = vperm.xlu0 %1142, %v1124
        %v1144 = vpop.permute.xlu0 %1143
        %1145 = vset.pattern.permute.xlu0 0
        %1146 = vperm.xlu0 %1145, %v1125
        %v1147 = vpop.permute.xlu0 %1146
        %1148 = vset.pattern.permute.xlu0 0
        %1149 = vperm.xlu0 %1148, %v1126
        %v1150 = vpop.permute.xlu0 %1149
        %1151 = vset.pattern.permute.xlu0 0
        %1152 = vperm.xlu0 %1151, %v1127
        %v1153 = vpop.permute.xlu0 %1152
        %1154 = vset.pattern.permute.xlu0 0
        %1155 = vperm.xlu0 %1154, %v1128
        %v1156 = vpop.permute.xlu0 %1155
        %1157 = vset.pattern.permute.xlu0 0
        %1158 = vperm.xlu0 %1157, %v1129
        %v1159 = vpop.permute.xlu0 %1158
        %1160 = vset.pattern.permute.xlu0 0
        %1161 = vperm.xlu0 %1160, %v1130
        %v1162 = vpop.permute.xlu0 %1161
        %1163 = vset.pattern.permute.xlu0 0
        %1164 = vperm.xlu0 %1163, %v1131
        %v1165 = vpop.permute.xlu0 %1164
        %1166 = vset.pattern.permute.xlu0 0
        %1167 = vperm.xlu0 %1166, %v1132
        %v1168 = vpop.permute.xlu0 %1167
        %1169 = vset.pattern.permute.xlu0 0
        %1170 = vperm.xlu0 %1169, %v1133
        %v1171 = vpop.permute.xlu0 %1170
        %1172 = vset.pattern.permute.xlu0 0
        %1173 = vperm.xlu0 %1172, %v1134
        %v1174 = vpop.permute.xlu0 %1173
        %1175 = vset.pattern.permute.xlu0 0
        %1176 = vperm.xlu0 %1175, %v1135
        %v1177 = vpop.permute.xlu0 %1176
        %1178 = vset.pattern.permute.xlu0 0
        %1179 = vperm.xlu0 %1178, %v1136
        %v1180 = vpop.permute.xlu0 %1179
        %1181 = vset.pattern.permute.xlu0 0
        %1182 = vperm.xlu0 %1181, %v1137
        %v1183 = vpop.permute.xlu0 %1182
        %1184 = vset.pattern.permute.xlu0 0
        %1185 = vperm.xlu0 %1184, %v1138
        %v1186 = vpop.permute.xlu0 %1185
        %vm1187 = vcmp.eq.s32.totalorder %v573, %v1141
        %vm1188 = vcmp.eq.s32.totalorder %v573, %v1144
        %vm1189 = vcmp.eq.s32.totalorder %v573, %v1147
        %vm1190 = vcmp.eq.s32.totalorder %v573, %v1150
        %vm1191 = vcmp.eq.s32.totalorder %v573, %v1153
        %vm1192 = vcmp.eq.s32.totalorder %v573, %v1156
        %vm1193 = vcmp.eq.s32.totalorder %v573, %v1159
        %vm1194 = vcmp.eq.s32.totalorder %v573, %v1162
        %vm1195 = vcmp.eq.s32.totalorder %v573, %v1165
        %vm1196 = vcmp.eq.s32.totalorder %v573, %v1168
        %vm1197 = vcmp.eq.s32.totalorder %v573, %v1171
        %vm1198 = vcmp.eq.s32.totalorder %v573, %v1174
        %vm1199 = vcmp.eq.s32.totalorder %v573, %v1177
        %vm1200 = vcmp.eq.s32.totalorder %v573, %v1180
        %vm1201 = vcmp.eq.s32.totalorder %v573, %v1183
        %vm1202 = vcmp.eq.s32.totalorder %v573, %v1186
        %v1203 = vsel %vm1187, 1, 0
        %v1204 = vsel %vm1188, 1, 0
        %v1205 = vsel %vm1189, 1, 0
        %v1206 = vsel %vm1190, 1, 0
        %v1207 = vsel %vm1191, 1, 0
        %v1208 = vsel %vm1192, 1, 0
        %v1209 = vsel %vm1193, 1, 0
        %v1210 = vsel %vm1194, 1, 0
        %v1211 = vsel %vm1195, 1, 0
        %v1212 = vsel %vm1196, 1, 0
        %v1213 = vsel %vm1197, 1, 0
        %v1214 = vsel %vm1198, 1, 0
        %v1215 = vsel %vm1199, 1, 0
        %v1216 = vsel %vm1200, 1, 0
        %v1217 = vsel %vm1201, 1, 0
        %v1218 = vsel %vm1202, 1, 0
        %v1219 = vcvt.s32.f32 %v1203
        %v1220 = vcvt.s32.f32 %v1204
        %v1221 = vcvt.s32.f32 %v1205
        %v1222 = vcvt.s32.f32 %v1206
        %v1223 = vcvt.s32.f32 %v1207
        %v1224 = vcvt.s32.f32 %v1208
        %v1225 = vcvt.s32.f32 %v1209
        %v1226 = vcvt.s32.f32 %v1210
        %v1227 = vcvt.s32.f32 %v1211
        %v1228 = vcvt.s32.f32 %v1212
        %v1229 = vcvt.s32.f32 %v1213
        %v1230 = vcvt.s32.f32 %v1214
        %v1231 = vcvt.s32.f32 %v1215
        %v1232 = vcvt.s32.f32 %v1216
        %v1233 = vcvt.s32.f32 %v1217
        %v1234 = vcvt.s32.f32 %v1218
        %s1235 = scalar_lea.vmem %s2, 256
        %v1236 = vld [vmem:[%s1235] sm:$0xff]
        %v1237 = vld [vmem:[%s1235 + $0x8] sm:$0xff]
        %v1238 = vld [vmem:[%s1235 + $0x10] sm:$0xff]
        %v1239 = vld [vmem:[%s1235 + $0x18] sm:$0xff]
        %v1240 = vld [vmem:[%s1235 + $0x20] sm:$0xff]
        %v1241 = vld [vmem:[%s1235 + $0x28] sm:$0xff]
        %v1242 = vld [vmem:[%s1235 + $0x30] sm:$0xff]
        %v1243 = vld [vmem:[%s1235 + $0x38] sm:$0xff]
        %v1244 = vld [vmem:[%s1235 + $0x40] sm:$0xff]
        %v1245 = vld [vmem:[%s1235 + $0x48] sm:$0xff]
        %v1246 = vld [vmem:[%s1235 + $0x50] sm:$0xff]
        %v1247 = vld [vmem:[%s1235 + $0x58] sm:$0xff]
        %v1248 = vld [vmem:[%s1235 + $0x60] sm:$0xff]
        %v1249 = vld [vmem:[%s1235 + $0x68] sm:$0xff]
        %v1250 = vld [vmem:[%s1235 + $0x70] sm:$0xff]
        %v1251 = vld [vmem:[%s1235 + $0x78] sm:$0xff]
        %1252 = vmatprep.subr.mxu0 0.0
        %1253 = vmatpush1.msra.mxu0 %v1236
        %1254 = vmatprep.subr.mxu0 0.0
        %1255 = vmatpush1.msra.mxu0 %v1237
        %1256 = vmatprep.subr.mxu0 0.0
        %1257 = vmatpush1.msra.mxu0 %v1238
        %1258 = vmatprep.subr.mxu0 0.0
        %1259 = vmatpush1.msra.mxu0 %v1239
        %1260 = vmatprep.subr.mxu0 0.0
        %1261 = vmatpush1.msra.mxu0 %v1240
        %1262 = vmatprep.subr.mxu0 0.0
        %1263 = vmatpush1.msra.mxu0 %v1241
        %1264 = vmatprep.subr.mxu0 0.0
        %1265 = vmatpush1.msra.mxu0 %v1242
        %1266 = vmatprep.subr.mxu0 0.0
        %1267 = vmatpush1.msra.mxu0 %v1243
        %1268 = vmatprep.subr.mxu0 0.0
        %1269 = vmatpush1.msra.mxu0 %v1244
        %1270 = vmatprep.subr.mxu0 0.0
        %1271 = vmatpush1.msra.mxu0 %v1245
        %1272 = vmatprep.subr.mxu0 0.0
        %1273 = vmatpush1.msra.mxu0 %v1246
        %1274 = vmatprep.subr.mxu0 0.0
        %1275 = vmatpush1.msra.mxu0 %v1247
        %1276 = vmatprep.subr.mxu0 0.0
        %1277 = vmatpush1.msra.mxu0 %v1248
        %1278 = vmatprep.subr.mxu0 0.0
        %1279 = vmatpush1.msra.mxu0 %v1249
        %1280 = vmatprep.subr.mxu0 0.0
        %1281 = vmatpush1.msra.mxu0 %v1250
        %1282 = vmatprep.subr.mxu0 0.0
        %1283 = vmatpush1.msra.mxu0 %v1251
        %1284 = vmatprep.subr.mxu0 0.0
        %1285 = vmatpush1.msra.mxu0 0.0
        %1286 = vmatprep.subr.mxu0 0.0
        %1287 = vmatpush1.msra.mxu0 0.0
        %1288 = vmatprep.subr.mxu0 0.0
        %1289 = vmatpush1.msra.mxu0 0.0
        %1290 = vmatprep.subr.mxu0 0.0
        %1291 = vmatpush1.msra.mxu0 0.0
        %1292 = vmatprep.subr.mxu0 0.0
        %1293 = vmatpush1.msra.mxu0 0.0
        %1294 = vmatprep.subr.mxu0 0.0
        %1295 = vmatpush1.msra.mxu0 0.0
        %1296 = vmatprep.subr.mxu0 0.0
        %1297 = vmatpush1.msra.mxu0 0.0
        %1298 = vmatprep.subr.mxu0 0.0
        %1299 = vmatpush1.msra.mxu0 0.0
        %1300 = vmatprep.subr.mxu0 0.0
        %1301 = vmatpush1.msra.mxu0 0.0
        %1302 = vmatprep.subr.mxu0 0.0
        %1303 = vmatpush1.msra.mxu0 0.0
        %1304 = vmatprep.subr.mxu0 0.0
        %1305 = vmatpush1.msra.mxu0 0.0
        %1306 = vmatprep.subr.mxu0 0.0
        %1307 = vmatpush1.msra.mxu0 0.0
        %1308 = vmatprep.subr.mxu0 0.0
        %1309 = vmatpush1.msra.mxu0 0.0
        %1310 = vmatprep.subr.mxu0 0.0
        %1311 = vmatpush1.msra.mxu0 0.0
        %1312 = vmatprep.subr.mxu0 0.0
        %1313 = vmatpush1.msra.mxu0 0.0
        %1314 = vmatprep.subr.mxu0 0.0
        %1315 = vmatpush1.msra.mxu0 0.0
        %1316 = vmatprep.mubr.f32.mxu0 0.0
        %1317 = vmatmul.mubr.f32.gmra.mrb[0].mxu0 %v1219
        %v1318 = vpop.f32.mrb[0].mxu0
        %v1319 = vadd.f32 0.0, %v1318
        %v1320 = vpop.f32.mrb[0].mxu0
        %1321 = vmatprep.mubr.f32.mxu0 0.0
        %1322 = vmatmul.mubr.f32.gmra.mrb[0].mxu0 %v1220
        %v1323 = vpop.f32.mrb[0].mxu0
        %v1324 = vadd.f32 0.0, %v1323
        %v1325 = vpop.f32.mrb[0].mxu0
        %1326 = vmatprep.mubr.f32.mxu0 0.0
        %1327 = vmatmul.mubr.f32.gmra.mrb[0].mxu0 %v1221
        %v1328 = vpop.f32.mrb[0].mxu0
        %v1329 = vadd.f32 0.0, %v1328
        %v1330 = vpop.f32.mrb[0].mxu0
        %1331 = vmatprep.mubr.f32.mxu0 0.0
        %1332 = vmatmul.mubr.f32.gmra.mrb[0].mxu0 %v1222
        %v1333 = vpop.f32.mrb[0].mxu0
        %v1334 = vadd.f32 0.0, %v1333
        %v1335 = vpop.f32.mrb[0].mxu0
        %1336 = vmatprep.mubr.f32.mxu0 0.0
        %1337 = vmatmul.mubr.f32.gmra.mrb[0].mxu0 %v1223
        %v1338 = vpop.f32.mrb[0].mxu0
        %v1339 = vadd.f32 0.0, %v1338
        %v1340 = vpop.f32.mrb[0].mxu0
        %1341 = vmatprep.mubr.f32.mxu0 0.0
        %1342 = vmatmul.mubr.f32.gmra.mrb[0].mxu0 %v1224
        %v1343 = vpop.f32.mrb[0].mxu0
        %v1344 = vadd.f32 0.0, %v1343
        %v1345 = vpop.f32.mrb[0].mxu0
        %1346 = vmatprep.mubr.f32.mxu0 0.0
        %1347 = vmatmul.mubr.f32.gmra.mrb[0].mxu0 %v1225
        %v1348 = vpop.f32.mrb[0].mxu0
        %v1349 = vadd.f32 0.0, %v1348
        %v1350 = vpop.f32.mrb[0].mxu0
        %1351 = vmatprep.mubr.f32.mxu0 0.0
        %1352 = vmatmul.mubr.f32.gmra.mrb[0].mxu0 %v1226
        %v1353 = vpop.f32.mrb[0].mxu0
        %v1354 = vadd.f32 0.0, %v1353
        %v1355 = vpop.f32.mrb[0].mxu0
        %1356 = vmatprep.mubr.f32.mxu0 0.0
        %1357 = vmatmul.mubr.f32.gmra.mrb[0].mxu0 %v1227
        %v1358 = vpop.f32.mrb[0].mxu0
        %v1359 = vadd.f32 0.0, %v1358
        %v1360 = vpop.f32.mrb[0].mxu0
        %1361 = vmatprep.mubr.f32.mxu0 0.0
        %1362 = vmatmul.mubr.f32.gmra.mrb[0].mxu0 %v1228
        %v1363 = vpop.f32.mrb[0].mxu0
        %v1364 = vadd.f32 0.0, %v1363
        %v1365 = vpop.f32.mrb[0].mxu0
        %1366 = vmatprep.mubr.f32.mxu0 0.0
        %1367 = vmatmul.mubr.f32.gmra.mrb[0].mxu0 %v1229
        %v1368 = vpop.f32.mrb[0].mxu0
        %v1369 = vadd.f32 0.0, %v1368
        %v1370 = vpop.f32.mrb[0].mxu0
        %1371 = vmatprep.mubr.f32.mxu0 0.0
        %1372 = vmatmul.mubr.f32.gmra.mrb[0].mxu0 %v1230
        %v1373 = vpop.f32.mrb[0].mxu0
        %v1374 = vadd.f32 0.0, %v1373
        %v1375 = vpop.f32.mrb[0].mxu0
        %1376 = vmatprep.mubr.f32.mxu0 0.0
        %1377 = vmatmul.mubr.f32.gmra.mrb[0].mxu0 %v1231
        %v1378 = vpop.f32.mrb[0].mxu0
        %v1379 = vadd.f32 0.0, %v1378
        %v1380 = vpop.f32.mrb[0].mxu0
        %1381 = vmatprep.mubr.f32.mxu0 0.0
        %1382 = vmatmul.mubr.f32.gmra.mrb[0].mxu0 %v1232
        %v1383 = vpop.f32.mrb[0].mxu0
        %v1384 = vadd.f32 0.0, %v1383
        %v1385 = vpop.f32.mrb[0].mxu0
        %1386 = vmatprep.mubr.f32.mxu0 0.0
        %1387 = vmatmul.mubr.f32.gmra.mrb[0].mxu0 %v1233
        %v1388 = vpop.f32.mrb[0].mxu0
        %v1389 = vadd.f32 0.0, %v1388
        %v1390 = vpop.f32.mrb[0].mxu0
        %1391 = vmatprep.mubr.f32.mxu0 0.0
        %1392 = vmatmul.mubr.f32.gmra.mrb[0].mxu0 %v1234
        %v1393 = vpop.f32.mrb[0].mxu0
        %v1394 = vadd.f32 0.0, %v1393
        %v1395 = vpop.f32.mrb[0].mxu0
        %1396 = vdwg.mxu0
        %v1397 = vadd.f32 %v1044, %v1319
        %v1398 = vadd.f32 %v1049, %v1324
        %v1399 = vadd.f32 %v1054, %v1329
        %v1400 = vadd.f32 %v1059, %v1334
        %v1401 = vadd.f32 %v1064, %v1339
        %v1402 = vadd.f32 %v1069, %v1344
        %v1403 = vadd.f32 %v1074, %v1349
        %v1404 = vadd.f32 %v1079, %v1354
        %v1405 = vadd.f32 %v1084, %v1359
        %v1406 = vadd.f32 %v1089, %v1364
        %v1407 = vadd.f32 %v1094, %v1369
        %v1408 = vadd.f32 %v1099, %v1374
        %v1409 = vadd.f32 %v1104, %v1379
        %v1410 = vadd.f32 %v1109, %v1384
        %v1411 = vadd.f32 %v1114, %v1389
        %v1412 = vadd.f32 %v1119, %v1394
        %v1413 = vlaneseq
        %v1414 = vshrl.u32 %v1413, 7
        %v1415 = vadd.s32 %v1414, 8
        %vm1416 = vcmp.lt.s32.totalorder %v1414, 14
        %vm1417 = vcmp.lt.s32.totalorder %v1415, 14
        %v1418 = vsel %vm1416, %v1397, -1e+30
        %v1419 = vsel %vm1417, %v1398, -1e+30
        %v1420 = vsel %vm1416, %v1399, -1e+30
        %v1421 = vsel %vm1417, %v1400, -1e+30
        %v1422 = vsel %vm1416, %v1401, -1e+30
        %v1423 = vsel %vm1417, %v1402, -1e+30
        %v1424 = vsel %vm1416, %v1403, -1e+30
        %v1425 = vsel %vm1417, %v1404, -1e+30
        %v1426 = vsel %vm1416, %v1405, -1e+30
        %v1427 = vsel %vm1417, %v1406, -1e+30
        %v1428 = vsel %vm1416, %v1407, -1e+30
        %v1429 = vsel %vm1417, %v1408, -1e+30
        %v1430 = vsel %vm1416, %v1409, -1e+30
        %v1431 = vsel %vm1417, %v1410, -1e+30
        %v1432 = vsel %vm1416, %v1411, -1e+30
        %v1433 = vsel %vm1417, %v1412, -1e+30
        %v1434 = vmax.f32 %v1418, %v1419
        %v1435 = vrot.slane %v1434, 4
        %v1436 = vmax.f32 %v1434, %v1435
        %v1437 = vrot.slane %v1436, 2
        %v1438 = vmax.f32 %v1436, %v1437
        %v1439 = vrot.slane %v1438, 1
        %v1440 = vmax.f32 %v1438, %v1439
        %v1441 = vmax.f32 %v1420, %v1421
        %v1442 = vrot.slane %v1441, 4
        %v1443 = vmax.f32 %v1441, %v1442
        %v1444 = vrot.slane %v1443, 2
        %v1445 = vmax.f32 %v1443, %v1444
        %v1446 = vrot.slane %v1445, 1
        %v1447 = vmax.f32 %v1445, %v1446
        %v1448 = vmax.f32 %v1422, %v1423
        %v1449 = vrot.slane %v1448, 4
        %v1450 = vmax.f32 %v1448, %v1449
        %v1451 = vrot.slane %v1450, 2
        %v1452 = vmax.f32 %v1450, %v1451
        %v1453 = vrot.slane %v1452, 1
        %v1454 = vmax.f32 %v1452, %v1453
        %v1455 = vmax.f32 %v1424, %v1425
        %v1456 = vrot.slane %v1455, 4
        %v1457 = vmax.f32 %v1455, %v1456
        %v1458 = vrot.slane %v1457, 2
        %v1459 = vmax.f32 %v1457, %v1458
        %v1460 = vrot.slane %v1459, 1
        %v1461 = vmax.f32 %v1459, %v1460
        %v1462 = vmax.f32 %v1426, %v1427
        %v1463 = vrot.slane %v1462, 4
        %v1464 = vmax.f32 %v1462, %v1463
        %v1465 = vrot.slane %v1464, 2
        %v1466 = vmax.f32 %v1464, %v1465
        %v1467 = vrot.slane %v1466, 1
        %v1468 = vmax.f32 %v1466, %v1467
        %v1469 = vmax.f32 %v1428, %v1429
        %v1470 = vrot.slane %v1469, 4
        %v1471 = vmax.f32 %v1469, %v1470
        %v1472 = vrot.slane %v1471, 2
        %v1473 = vmax.f32 %v1471, %v1472
        %v1474 = vrot.slane %v1473, 1
        %v1475 = vmax.f32 %v1473, %v1474
        %v1476 = vmax.f32 %v1430, %v1431
        %v1477 = vrot.slane %v1476, 4
        %v1478 = vmax.f32 %v1476, %v1477
        %v1479 = vrot.slane %v1478, 2
        %v1480 = vmax.f32 %v1478, %v1479
        %v1481 = vrot.slane %v1480, 1
        %v1482 = vmax.f32 %v1480, %v1481
        %v1483 = vmax.f32 %v1432, %v1433
        %v1484 = vrot.slane %v1483, 4
        %v1485 = vmax.f32 %v1483, %v1484
        %v1486 = vrot.slane %v1485, 2
        %v1487 = vmax.f32 %v1485, %v1486
        %v1488 = vrot.slane %v1487, 1
        %v1489 = vmax.f32 %v1487, %v1488
        %v1490 = vld [vmem:[%s3] sm:$0x1]
        %v1492 = vlaneseq
        %v1493 = vshrl.u32 %v1492, 7
        %v1494 = vsub.s32 0, %v1493
        %v1495 = vrot.slane %v1490, %v1494
        %v1497 = vadd.f32 %v1440, %v1495
        %v1498 = vadd.f32 %v1447, %v1495
        %v1499 = vadd.f32 %v1454, %v1495
        %v1500 = vadd.f32 %v1461, %v1495
        %v1501 = vadd.f32 %v1468, %v1495
        %v1502 = vadd.f32 %v1475, %v1495
        %v1503 = vadd.f32 %v1482, %v1495
        %v1504 = vadd.f32 %v1489, %v1495
        %v1505 = vld [vmem:[%s567] sm:$0xff]
        %1506 = vset.pattern.permute.xlu0 0
        %1507 = vperm.xlu0 %1506, %v1505
        %v1508 = vpop.permute.xlu0 %1507
        %vm1509 = vcmp.eq.s32.totalorder %v573, %v1508
        %v1510 = vsel %vm1509, 1, 0
        %v1511 = vcvt.s32.f32 %v1510
        %v1512 = vld [vmem:[%s4] sm:$0xff]
        %v1513 = vld [vmem:[%s4 + $0x8] sm:$0xff]
        %v1514 = vld [vmem:[%s4 + $0x10] sm:$0xff]
        %v1515 = vld [vmem:[%s4 + $0x18] sm:$0xff]
        %v1516 = vld [vmem:[%s4 + $0x20] sm:$0xff]
        %v1517 = vld [vmem:[%s4 + $0x28] sm:$0xff]
        %v1518 = vld [vmem:[%s4 + $0x30] sm:$0xff]
        %v1519 = vld [vmem:[%s4 + $0x38] sm:$0xff]
        %v1520 = vld [vmem:[%s4 + $0x40] sm:$0xff]
        %v1521 = vld [vmem:[%s4 + $0x48] sm:$0xff]
        %v1522 = vld [vmem:[%s4 + $0x50] sm:$0xff]
        %v1523 = vld [vmem:[%s4 + $0x58] sm:$0xff]
        %v1524 = vld [vmem:[%s4 + $0x60] sm:$0xff]
        %v1525 = vld [vmem:[%s4 + $0x68] sm:$0xff]
        %v1526 = vld [vmem:[%s4 + $0x70] sm:$0xff]
        %v1527 = vld [vmem:[%s4 + $0x78] sm:$0xff]
        %1528 = vmatprep.subr.mxu0 0.0
        %1529 = vmatpush1.msra.mxu0 %v1512
        %1530 = vmatprep.subr.mxu0 0.0
        %1531 = vmatpush1.msra.mxu0 %v1513
        %1532 = vmatprep.subr.mxu0 0.0
        %1533 = vmatpush1.msra.mxu0 %v1514
        %1534 = vmatprep.subr.mxu0 0.0
        %1535 = vmatpush1.msra.mxu0 %v1515
        %1536 = vmatprep.subr.mxu0 0.0
        %1537 = vmatpush1.msra.mxu0 %v1516
        %1538 = vmatprep.subr.mxu0 0.0
        %1539 = vmatpush1.msra.mxu0 %v1517
        %1540 = vmatprep.subr.mxu0 0.0
        %1541 = vmatpush1.msra.mxu0 %v1518
        %1542 = vmatprep.subr.mxu0 0.0
        %1543 = vmatpush1.msra.mxu0 %v1519
        %1544 = vmatprep.subr.mxu0 0.0
        %1545 = vmatpush1.msra.mxu0 %v1520
        %1546 = vmatprep.subr.mxu0 0.0
        %1547 = vmatpush1.msra.mxu0 %v1521
        %1548 = vmatprep.subr.mxu0 0.0
        %1549 = vmatpush1.msra.mxu0 %v1522
        %1550 = vmatprep.subr.mxu0 0.0
        %1551 = vmatpush1.msra.mxu0 %v1523
        %1552 = vmatprep.subr.mxu0 0.0
        %1553 = vmatpush1.msra.mxu0 %v1524
        %1554 = vmatprep.subr.mxu0 0.0
        %1555 = vmatpush1.msra.mxu0 %v1525
        %1556 = vmatprep.subr.mxu0 0.0
        %1557 = vmatpush1.msra.mxu0 %v1526
        %1558 = vmatprep.subr.mxu0 0.0
        %1559 = vmatpush1.msra.mxu0 %v1527
        %1560 = vmatprep.subr.mxu0 0.0
        %1561 = vmatpush1.msra.mxu0 0.0
        %1562 = vmatprep.subr.mxu0 0.0
        %1563 = vmatpush1.msra.mxu0 0.0
        %1564 = vmatprep.subr.mxu0 0.0
        %1565 = vmatpush1.msra.mxu0 0.0
        %1566 = vmatprep.subr.mxu0 0.0
        %1567 = vmatpush1.msra.mxu0 0.0
        %1568 = vmatprep.subr.mxu0 0.0
        %1569 = vmatpush1.msra.mxu0 0.0
        %1570 = vmatprep.subr.mxu0 0.0
        %1571 = vmatpush1.msra.mxu0 0.0
        %1572 = vmatprep.subr.mxu0 0.0
        %1573 = vmatpush1.msra.mxu0 0.0
        %1574 = vmatprep.subr.mxu0 0.0
        %1575 = vmatpush1.msra.mxu0 0.0
        %1576 = vmatprep.subr.mxu0 0.0
        %1577 = vmatpush1.msra.mxu0 0.0
        %1578 = vmatprep.subr.mxu0 0.0
        %1579 = vmatpush1.msra.mxu0 0.0
        %1580 = vmatprep.subr.mxu0 0.0
        %1581 = vmatpush1.msra.mxu0 0.0
        %1582 = vmatprep.subr.mxu0 0.0
        %1583 = vmatpush1.msra.mxu0 0.0
        %1584 = vmatprep.subr.mxu0 0.0
        %1585 = vmatpush1.msra.mxu0 0.0
        %1586 = vmatprep.subr.mxu0 0.0
        %1587 = vmatpush1.msra.mxu0 0.0
        %1588 = vmatprep.subr.mxu0 0.0
        %1589 = vmatpush1.msra.mxu0 0.0
        %1590 = vmatprep.subr.mxu0 0.0
        %1591 = vmatpush1.msra.mxu0 0.0
        %1592 = vmatprep.mubr.f32.mxu0 0.0
        %1593 = vmatmul.mubr.f32.gmra.mrb[0].mxu0 %v1511
        %v1594 = vpop.f32.mrb[0].mxu0
        %v1595 = vadd.f32 0.0, %v1594
        %v1596 = vpop.f32.mrb[0].mxu0
        %1597 = vdwg.mxu0
        %vm1598 = vcmp.lt.s32.totalorder %v573, 25
        %v1607 = vrot.slane %v1498, 7
        %vm1608 = vcmask 1041409
        %v1609 = vsel %vm1608, %v1607, %v1497
        %v1610 = vrot.slane %v1499, 6
        %vm1611 = vcmask 1042434
        %v1612 = vsel %vm1611, %v1610, %v1609
        %v1613 = vrot.slane %v1500, 5
        %vm1614 = vcmask 1043459
        %v1615 = vsel %vm1614, %v1613, %v1612
        %v1616 = vrot.slane %v1501, 4
        %vm1617 = vcmask 1044484
        %v1618 = vsel %vm1617, %v1616, %v1615
        %v1619 = vrot.slane %v1502, 3
        %vm1620 = vcmask 1045509
        %v1621 = vsel %vm1620, %v1619, %v1618
        %v1622 = vrot.slane %v1503, 2
        %vm1623 = vcmask 1046534
        %v1624 = vsel %vm1623, %v1622, %v1621
        %v1625 = vrot.slane %v1504, 1
        %vm1626 = vcmask 1047559
        %v1627 = vsel %vm1626, %v1625, %v1624
        %v1629 = vsel %vm1598, %v1627, -inf
        %1630 = vmax.xlane.f32.xlu0 %v1629
        %v1631 = vpop.xlane.xlu0 %1630
        %v1632 = vsel %vm1598, %v1627, inf
        %1633 = vmin.xlane.f32.xlu0 %v1632
        %v1634 = vpop.xlane.xlu0 %1633
        %v1635 = vmax.f32 %v1595, %v1631
        %v1636 = vmin.f32 %v1595, %v1634
        %v1637 = vld [vmem:[%s5] sm:$0x1]
        %v1639 = vlaneseq
        %v1640 = vshrl.u32 %v1639, 7
        %v1641 = vsub.s32 0, %v1640
        %v1642 = vrot.slane %v1637, %v1641
        %vm1644 = vcmp.ge.f32.partialorder %v1642, 0.0
        %1646 = vset.pattern.permute.xlu0 0
        %1647 = vperm.xlu0 %1646, %v1635
        %v1648 = vpop.permute.xlu0 %1647
        %1651 = vset.pattern.permute.xlu0 1
        %1652 = vperm.xlu0 %1651, %v1636
        %v1653 = vpop.permute.xlu0 %1652
        %v1655 = vsel %vm1644, %v1648, %v1653
        %v1656 = vmul.f32 %v1655, %v1642
        %v1657 = vld [vmem:[%s6] sm:$0x1]
        %v1659 = vlaneseq
        %v1660 = vshrl.u32 %v1659, 7
        %v1661 = vsub.s32 0, %v1660
        %v1662 = vrot.slane %v1657, %v1661
        %v1664 = vadd.f32 %v1656, %v1662
        %v1665 = vld [vmem:[%s7] sm:$0xff]
        %v1666 = vld [vmem:[%s7 + $0x8] sm:$0xff]
        %v1667 = vld [vmem:[%s7 + $0x10] sm:$0xff]
        %v1668 = vld [vmem:[%s7 + $0x18] sm:$0xff]
        %v1669 = vld [vmem:[%s7 + $0x20] sm:$0xff]
        %v1670 = vld [vmem:[%s7 + $0x28] sm:$0xff]
        %v1671 = vld [vmem:[%s7 + $0x30] sm:$0xff]
        %v1672 = vld [vmem:[%s7 + $0x38] sm:$0xff]
        %v1673 = vld [vmem:[%s8] sm:$0x1]
        %v1675 = vlaneseq
        %v1676 = vshrl.u32 %v1675, 7
        %v1677 = vsub.s32 0, %v1676
        %v1678 = vrot.slane %v1673, %v1677
        %vm1680 = vcmask 523264
        %v1682 = vsel %vm1680, %v1664, 0
        %1684 = vmatprep.subr.mxu0 0.0
        %1685 = vmatpush1.msra.mxu0 %v1665
        %1686 = vmatprep.subr.mxu0 0.0
        %1687 = vmatpush1.msra.mxu0 %v1666
        %1688 = vmatprep.subr.mxu0 0.0
        %1689 = vmatpush1.msra.mxu0 %v1667
        %1690 = vmatprep.subr.mxu0 0.0
        %1691 = vmatpush1.msra.mxu0 %v1668
        %1692 = vmatprep.subr.mxu0 0.0
        %1693 = vmatpush1.msra.mxu0 %v1669
        %1694 = vmatprep.subr.mxu0 0.0
        %1695 = vmatpush1.msra.mxu0 %v1670
        %1696 = vmatprep.subr.mxu0 0.0
        %1697 = vmatpush1.msra.mxu0 %v1671
        %1698 = vmatprep.subr.mxu0 0.0
        %1699 = vmatpush1.msra.mxu0 %v1672
        %1700 = vmatprep.subr.mxu0 0.0
        %1701 = vmatpush1.msra.mxu0 0.0
        %1702 = vmatprep.subr.mxu0 0.0
        %1703 = vmatpush1.msra.mxu0 0.0
        %1704 = vmatprep.subr.mxu0 0.0
        %1705 = vmatpush1.msra.mxu0 0.0
        %1706 = vmatprep.subr.mxu0 0.0
        %1707 = vmatpush1.msra.mxu0 0.0
        %1708 = vmatprep.subr.mxu0 0.0
        %1709 = vmatpush1.msra.mxu0 0.0
        %1710 = vmatprep.subr.mxu0 0.0
        %1711 = vmatpush1.msra.mxu0 0.0
        %1712 = vmatprep.subr.mxu0 0.0
        %1713 = vmatpush1.msra.mxu0 0.0
        %1714 = vmatprep.subr.mxu0 0.0
        %1715 = vmatpush1.msra.mxu0 0.0
        %1716 = vmatprep.subr.mxu0 0.0
        %1717 = vmatpush1.msra.mxu0 0.0
        %1718 = vmatprep.subr.mxu0 0.0
        %1719 = vmatpush1.msra.mxu0 0.0
        %1720 = vmatprep.subr.mxu0 0.0
        %1721 = vmatpush1.msra.mxu0 0.0
        %1722 = vmatprep.subr.mxu0 0.0
        %1723 = vmatpush1.msra.mxu0 0.0
        %1724 = vmatprep.subr.mxu0 0.0
        %1725 = vmatpush1.msra.mxu0 0.0
        %1726 = vmatprep.subr.mxu0 0.0
        %1727 = vmatpush1.msra.mxu0 0.0
        %1728 = vmatprep.subr.mxu0 0.0
        %1729 = vmatpush1.msra.mxu0 0.0
        %1730 = vmatprep.subr.mxu0 0.0
        %1731 = vmatpush1.msra.mxu0 0.0
        %1732 = vmatprep.subr.mxu0 0.0
        %1733 = vmatpush1.msra.mxu0 0.0
        %1734 = vmatprep.subr.mxu0 0.0
        %1735 = vmatpush1.msra.mxu0 0.0
        %1736 = vmatprep.subr.mxu0 0.0
        %1737 = vmatpush1.msra.mxu0 0.0
        %1738 = vmatprep.subr.mxu0 0.0
        %1739 = vmatpush1.msra.mxu0 0.0
        %1740 = vmatprep.subr.mxu0 0.0
        %1741 = vmatpush1.msra.mxu0 0.0
        %1742 = vmatprep.subr.mxu0 0.0
        %1743 = vmatpush1.msra.mxu0 0.0
        %1744 = vmatprep.subr.mxu0 0.0
        %1745 = vmatpush1.msra.mxu0 0.0
        %1746 = vmatprep.subr.mxu0 0.0
        %1747 = vmatpush1.msra.mxu0 0.0
        %1748 = vmatprep.mubr.f32.mxu0 0.0
        %1749 = vmatmul.mubr.f32.gmra.mrb[0].mxu0 %v1682
        %v1750 = vpop.f32.mrb[0].mxu0
        %v1751 = vadd.f32 %v1678, %v1750
        %v1752 = vpop.f32.mrb[0].mxu0
        %1753 = vdwg.mxu0
        %1754 = vmax.xlane.f32.xlu0 %v1751
        %v1755 = vpop.xlane.xlu0 %1754
        %vm1756 = vcmp.eq.f32.partialorder %v1751, %v1755
        %v1757 = vsel %vm1756, %v573, 128
        %v1758 = vand.u32 %v1757, 65535
        %v1759 = vshra.s32 %v1757, 16
        %v1760 = vcvt.s32.f32 %v1758
        %v1761 = vcvt.s32.f32 %v1759
        %1762 = vmin.xlane.f32.xlu0 %v1761
        %v1763 = vpop.xlane.xlu0 %1762
        %vm1764 = vcmp.eq.f32.partialorder %v1761, %v1763
        %v1765 = vsel %vm1764, %v1760, inf
        %1766 = vmin.xlane.f32.xlu0 %v1765
        %v1767 = vpop.xlane.xlu0 %1766
        %v1768 = vcvt.f32.s32 %v1767
        %v1769 = vcvt.f32.s32 %v1763
        %v1770 = vshll.u32 %v1769, 16
        %v1771 = vadd.s32 %v1770, %v1768
        %v1772 = vcvt.s32.f32 %v1771
        %vm1773 = vcmp.eq.s32.totalorder %v573, 5
        %v1774 = vsel %vm1773, %v1755, %v1751
        %vm1775 = vcmp.eq.s32.totalorder %v573, 6
        %v1776 = vsel %vm1775, %v1772, %v1774
        %1777 = vst [vmem:[%s571] sm:$0xff] %v1776
        %p1778 = scmp.lt.s32.totalorder %s20, 1
        %s1779 = scalar_select %p1778, %s20, 1
        %s1780 = smul.addr %s1779, 8
        %s1781 = scalar_lea.vmem %s9, %s1780
        // Predicated region
        $region95: #{ner_forward.1} parent=89 // pred_check
          %p1782 = pneg %p237
        $region96: #{ner_forward.1} parent=89 // pred_check_branch
          %1784 = sbr.rel (%p1782) target = $region98
        $region97: #{ner_forward.1} parent=89 // pred_region
          _
        $region98: #{ner_forward.1} parent=89 // pred_fallthru
          _
      $region90: #{ner_forward.1} parent=5 // pred_fallthru
        _
      %p1785 = scmp.le.s32.totalorder 2, %s15
      // Predicated region
      $region99: #{ner_forward.1} parent=5 // pred_check
        %p1786 = pneg %p1785
      $region100: #{ner_forward.1} parent=5 // pred_check_branch
        %1788 = sbr.rel (%p1786) target = $region102
      $region101: #{ner_forward.1} parent=5 // pred_region
        %s1789 = ssub.s32 %s15, 2
        // Predicated region
        $region103: #{ner_forward.1} parent=101 // pred_check
          %p1790 = pneg %p243
        $region104: #{ner_forward.1} parent=101 // pred_check_branch
          %1792 = sbr.rel (%p1790) target = $region106
        $region105: #{ner_forward.1} parent=101 // pred_region
          %p1793 = scmp.lt.s32.totalorder %s21, 1
          %s1794 = scalar_select %p1793, %s21, 1
          %s1795 = smul.addr %s1794, 8
          %s1796 = scalar_lea.vmem %s9, %s1795
        $region106: #{ner_forward.1} parent=101 // pred_fallthru
          _
      $region102: #{ner_forward.1} parent=5 // pred_fallthru
        _
    $region6: #{ner_forward.1} parent=1 // loop_footer
      %s19 = sadd.s32 1, %s15
    $region7: #{ner_forward.1} parent=1 // loop_footer_branch
      %14 = sbr.rel target = $region3
    $region8: #{ner_forward.1} parent=1 // loop_exit
      _

</llo_original>
